<compile_context>
chip_gen: v5e
topology: v5e:2x2
jax: 0.10.0
libtpu: 0.0.40
codegen_flags: <defaults>
</compile_context>

<pallas_src>
import jax
import jax.numpy as jnp
import numpy as np
from jax.experimental import pallas as pl
from jax.experimental.pallas import tpu as pltpu

# ---- model hyperparameters (small, consistent with the module) ----
BATCH = 2
SEQ = 16
EMBED = 64       # embed_dim (divisible by heads)
HEADS = 4
D_K = EMBED // HEADS
D_FF = 128
LN_EPS = 1e-5

assert EMBED <= 128 and D_FF <= 128, "param slab packing assumes <=128 lanes"


def _layernorm(x, gamma, beta):
    # LayerNorm over last dim, matches torch.nn.LayerNorm (biased variance).
    mean = jnp.mean(x, axis=-1, keepdims=True)
    var = jnp.mean(jnp.square(x - mean), axis=-1, keepdims=True)
    inv = jax.lax.rsqrt(var + LN_EPS)
    return (x - mean) * inv * gamma + beta


def transformer_block_kernel(
    x_ref,       # (B*S, E)
    wqkv_ref,    # (E, 3E)  -- [Wq * 1/sqrt(d_k) | Wk | Wv], already (in, out)
    wo_ref,      # (E, E)
    w1_ref,      # (E, D_FF)
    w2_ref,      # (D_FF, E)
    vec_ref,     # (8, 128) packed small vectors: g1,b1,bb1,bb2,g2,b2
    o_ref,       # (B*S, E)
):
    x = x_ref[...]                                        # (B*S, E), f32

    # --- fused QKV projection: one wide MXU matmul ---
    qkv = jnp.dot(x, wqkv_ref[...], preferred_element_type=jnp.float32)
    q = qkv[:, 0 * EMBED:1 * EMBED]                       # scale already folded in
    k = qkv[:, 1 * EMBED:2 * EMBED]
    v = qkv[:, 2 * EMBED:3 * EMBED]

    # per-batch view (row-dim split only; no lane relayout)
    q3 = q.reshape(BATCH, SEQ, EMBED)
    k3 = k.reshape(BATCH, SEQ, EMBED)
    v3 = v.reshape(BATCH, SEQ, EMBED)

    # --- multi-head attention: unrolled head loop, static column slices ---
    head_outs = []
    for h in range(HEADS):
        lo = h * D_K
        hi = lo + D_K
        qh = q3[:, :, lo:hi]                              # (B, S, D_K)
        kh = k3[:, :, lo:hi]
        vh = v3[:, :, lo:hi]

        # scores[b, s, t] = sum_d qh[b,s,d] * kh[b,t,d]   (scale pre-folded)
        s = jax.lax.dot_general(
            qh, kh, (((2,), (2,)), ((0,), (0,))),
            preferred_element_type=jnp.float32)           # (B, S, S)

        # softmax over last axis; EUP reciprocal instead of VALU divide
        m = jnp.max(s, axis=-1, keepdims=True)
        e = jnp.exp(s - m)
        denom = jnp.sum(e, axis=-1, keepdims=True)
        p = e * pl.reciprocal(denom, approx=False)

        ah = jax.lax.dot_general(
            p, vh, (((2,), (1,)), ((0,), (0,))),
            preferred_element_type=jnp.float32)           # (B, S, D_K)
        head_outs.append(ah)

    attn = jnp.concatenate(head_outs, axis=-1)            # (B, S, E)
    attn = attn.reshape(BATCH * SEQ, EMBED)
    attn_out = jnp.dot(attn, wo_ref[...], preferred_element_type=jnp.float32)

    # --- unpack small-vector slab ---
    vec = vec_ref[...]
    g1 = vec[0:1, 0:EMBED]
    b1 = vec[1:2, 0:EMBED]
    bb1 = vec[2:3, 0:D_FF]
    bb2 = vec[3:4, 0:EMBED]
    g2 = vec[4:5, 0:EMBED]
    b2 = vec[5:6, 0:EMBED]

    # --- residual + layernorm 1 ---
    x1 = _layernorm(attn_out + x, g1, b1)

    # --- feed forward: Linear -> ReLU -> Linear ---
    h_ff = jnp.dot(x1, w1_ref[...], preferred_element_type=jnp.float32) + bb1
    h_ff = jnp.maximum(h_ff, 0.0)
    ff = jnp.dot(h_ff, w2_ref[...], preferred_element_type=jnp.float32) + bb2

    # --- residual + layernorm 2 ---
    out = _layernorm(ff + x1, g2, b2)
    o_ref[...] = out.astype(o_ref.dtype)


def prepare_kernel_params(params):
    """One-time static fold: fuse QKV (with 1/sqrt(d_k) folded into Wq) and
    pack the six tiny vectors into a single (8, 128) slab."""
    (wq, wk, wv, wo, g1, b1, w1, bb1, w2, bb2, g2, b2) = params
    scale = np.float32(1.0 / np.sqrt(D_K))
    wqkv = jnp.concatenate([wq * scale, wk, wv], axis=1)   # (E, 3E)

    slab = jnp.zeros((8, 128), jnp.float32)
    slab = slab.at[0, 0:EMBED].set(g1)
    slab = slab.at[1, 0:EMBED].set(b1)
    slab = slab.at[2, 0:D_FF].set(bb1)
    slab = slab.at[3, 0:EMBED].set(bb2)
    slab = slab.at[4, 0:EMBED].set(g2)
    slab = slab.at[5, 0:EMBED].set(b2)
    return (wqkv, wo, w1, w2, slab)


def transformer_block(x, kparams):
    B, S, E = x.shape
    assert (S, E) == (SEQ, EMBED) and B == BATCH
    wqkv, wo, w1, w2, slab = kparams

    M = B * S
    x2d = x.reshape(M, E)   # fold batch into the matmul M dimension

    out2d = pl.pallas_call(
        transformer_block_kernel,
        out_shape=jax.ShapeDtypeStruct((M, E), x.dtype),
        grid_spec=pltpu.PrefetchScalarGridSpec(
            num_scalar_prefetch=0,
            grid=(1,),                         # collapsed grid: single step
            in_specs=[
                pl.BlockSpec((M, E), lambda i: (0, 0)),          # x
                pl.BlockSpec((E, 3 * E), lambda i: (0, 0)),      # fused Wqkv
                pl.BlockSpec((E, E), lambda i: (0, 0)),          # Wo
                pl.BlockSpec((E, D_FF), lambda i: (0, 0)),       # FFN W1
                pl.BlockSpec((D_FF, E), lambda i: (0, 0)),       # FFN W2
                pl.BlockSpec((8, 128), lambda i: (0, 0)),        # packed vectors
            ],
            out_specs=pl.BlockSpec((M, E), lambda i: (0, 0)),
        ),
        compiler_params=pltpu.CompilerParams(
            dimension_semantics=("arbitrary",)),
    )(x2d, wqkv, wo, w1, w2, slab)

    return out2d.reshape(B, S, E)


def _reference(x, params):
    (wq, wk, wv, wo, g1, b1, w1, bb1, w2, bb2, g2, b2) = params
    B, S, E = x.shape
    q = (x @ wq).reshape(B, S, HEADS, D_K).transpose(0, 2, 1, 3)
    k = (x @ wk).reshape(B, S, HEADS, D_K).transpose(0, 2, 1, 3)
    v = (x @ wv).reshape(B, S, HEADS, D_K).transpose(0, 2, 1, 3)
    s = jnp.einsum('bhsd,bhtd->bhst', q, k) / np.sqrt(D_K)
    p = jax.nn.softmax(s, axis=-1)
    a = jnp.einsum('bhst,bhtd->bhsd', p, v).transpose(0, 2, 1, 3).reshape(B, S, E)
    a = a @ wo

    def ln(y, g, bta):
        mu = y.mean(-1, keepdims=True)
        var = jnp.mean((y - mu) ** 2, -1, keepdims=True)
        return (y - mu) / jnp.sqrt(var + LN_EPS) * g + bta

    x1 = ln(a + x, g1, b1)
    ff = jnp.maximum(x1 @ w1 + bb1, 0.0) @ w2 + bb2
    return ln(ff + x1, g2, b2)


def _init_params(key):
    ks = jax.random.split(key, 8)
    scale_e = 1.0 / np.sqrt(EMBED)
    scale_f = 1.0 / np.sqrt(D_FF)
    # nn.Linear weight is (out, in); we build the already-transposed (in, out) matrices.
    wq = jax.random.normal(ks[0], (EMBED, EMBED), jnp.float32) * scale_e
    wk = jax.random.normal(ks[1], (EMBED, EMBED), jnp.float32) * scale_e
    wv = jax.random.normal(ks[2], (EMBED, EMBED), jnp.float32) * scale_e
    wo = jax.random.normal(ks[3], (EMBED, EMBED), jnp.float32) * scale_e
    g1 = jnp.ones((EMBED,), jnp.float32)
    b1 = jnp.zeros((EMBED,), jnp.float32)
    w1 = jax.random.normal(ks[4], (EMBED, D_FF), jnp.float32) * scale_e
    bb1 = jax.random.normal(ks[5], (D_FF,), jnp.float32) * scale_e
    w2 = jax.random.normal(ks[6], (D_FF, EMBED), jnp.float32) * scale_f
    bb2 = jax.random.normal(ks[7], (EMBED,), jnp.float32) * scale_f
    g2 = jnp.ones((EMBED,), jnp.float32)
    b2 = jnp.zeros((EMBED,), jnp.float32)
    return (wq, wk, wv, wo, g1, b1, w1, bb1, w2, bb2, g2, b2)


if __name__ == "__main__":
    key = jax.random.PRNGKey(0)
    kx, kp = jax.random.split(key)
    x = jax.random.normal(kx, (BATCH, SEQ, EMBED), jnp.float32)
    params = _init_params(kp)
    kparams = prepare_kernel_params(params)   # one-time static prep

    out = transformer_block(x, kparams)
    out = jax.block_until_ready(out)

    ref = _reference(x, params)
    np.testing.assert_allclose(np.asarray(out), np.asarray(ref), atol=1e-4, rtol=1e-4)
    print("KERNEL_OK")
</pallas_src>

<mosaic_0001>
module attributes {stable_mosaic.version = 11 : i64} {
  func.func @transformer_block_kernel(%arg0: i32, %arg1: memref<32x64xf32, #tpu.memory_space<vmem>>, %arg2: memref<64x192xf32, #tpu.memory_space<vmem>>, %arg3: memref<64x64xf32, #tpu.memory_space<vmem>>, %arg4: memref<64x128xf32, #tpu.memory_space<vmem>>, %arg5: memref<128x64xf32, #tpu.memory_space<vmem>>, %arg6: memref<8x128xf32, #tpu.memory_space<vmem>>, %arg7: memref<32x64xf32, #tpu.memory_space<vmem>>) attributes {dimension_semantics = [#tpu.dimension_semantics<arbitrary>], iteration_bounds = array<i64: 1>, scalar_prefetch = 0 : i64, scratch_operands = 0 : i64, tpu.core_type = #tpu.core_type<tc>, window_params = [{pipeline_mode = #tpu.pipeline_mode<synchronous>, transform_indices = @transform_0, window_bounds = array<i64: 32, 64>}, {pipeline_mode = #tpu.pipeline_mode<synchronous>, transform_indices = @transform_1, window_bounds = array<i64: 64, 192>}, {pipeline_mode = #tpu.pipeline_mode<synchronous>, transform_indices = @transform_2, window_bounds = array<i64: 64, 64>}, {pipeline_mode = #tpu.pipeline_mode<synchronous>, transform_indices = @transform_3, window_bounds = array<i64: 64, 128>}, {pipeline_mode = #tpu.pipeline_mode<synchronous>, transform_indices = @transform_4, window_bounds = array<i64: 128, 64>}, {pipeline_mode = #tpu.pipeline_mode<synchronous>, transform_indices = @transform_5, window_bounds = array<i64: 8, 128>}, {pipeline_mode = #tpu.pipeline_mode<synchronous>, transform_indices = @transform_6, window_bounds = array<i64: 32, 64>}]} {
    %c0 = arith.constant 0 : index
    %c0_0 = arith.constant 0 : index
    %0 = vector.load %arg1[%c0, %c0_0] : memref<32x64xf32, #tpu.memory_space<vmem>>, vector<32x64xf32>
    %c0_1 = arith.constant 0 : index
    %c0_2 = arith.constant 0 : index
    %1 = vector.load %arg2[%c0_1, %c0_2] : memref<64x192xf32, #tpu.memory_space<vmem>>, vector<64x192xf32>
    %cst = arith.constant dense<0.000000e+00> : vector<32x192xf32>
    %2 = tpu.matmul %0, %1, %cst {dimension_numbers = #tpu.dot_dimension_numbers<[1], [0], [0], [1], [0, 0, 1, 1], [], []>} : vector<32x64xf32>, vector<64x192xf32>, vector<32x192xf32> -> vector<32x192xf32>
    %3 = vector.extract_strided_slice %2 {offsets = [0, 0], sizes = [32, 64], strides = [1, 1]} : vector<32x192xf32> to vector<32x64xf32>
    %4 = vector.extract_strided_slice %2 {offsets = [0, 64], sizes = [32, 64], strides = [1, 1]} : vector<32x192xf32> to vector<32x64xf32>
    %5 = vector.extract_strided_slice %2 {offsets = [0, 128], sizes = [32, 64], strides = [1, 1]} : vector<32x192xf32> to vector<32x64xf32>
    %6 = vector.shape_cast %3 : vector<32x64xf32> to vector<2x16x64xf32>
    %7 = vector.shape_cast %4 : vector<32x64xf32> to vector<2x16x64xf32>
    %8 = vector.shape_cast %5 : vector<32x64xf32> to vector<2x16x64xf32>
    %9 = vector.extract_strided_slice %6 {offsets = [0, 0, 0], sizes = [2, 16, 16], strides = [1, 1, 1]} : vector<2x16x64xf32> to vector<2x16x16xf32>
    %10 = vector.extract_strided_slice %7 {offsets = [0, 0, 0], sizes = [2, 16, 16], strides = [1, 1, 1]} : vector<2x16x64xf32> to vector<2x16x16xf32>
    %11 = vector.extract_strided_slice %8 {offsets = [0, 0, 0], sizes = [2, 16, 16], strides = [1, 1, 1]} : vector<2x16x64xf32> to vector<2x16x16xf32>
    %cst_3 = arith.constant dense<0.000000e+00> : vector<2x16x16xf32>
    %12 = tpu.matmul %9, %10, %cst_3 {dimension_numbers = #tpu.dot_dimension_numbers<[2], [2], [1], [1], [0, 0, 0, 1, 1, 1], [0], [0]>} : vector<2x16x16xf32>, vector<2x16x16xf32>, vector<2x16x16xf32> -> vector<2x16x16xf32>
    %cst_4 = arith.constant dense<0xFF800000> : vector<2x16xf32>
    %13 = vector.multi_reduction <maximumf>, %12, %cst_4 [2] : vector<2x16x16xf32> to vector<2x16xf32>
    %14 = vector.shape_cast %13 : vector<2x16xf32> to vector<2x16x1xf32>
    %15 = vector.broadcast %14 : vector<2x16x1xf32> to vector<2x16x16xf32>
    %16 = arith.subf %12, %15 : vector<2x16x16xf32>
    %17 = math.exp %16 : vector<2x16x16xf32>
    %cst_5 = arith.constant dense<0.000000e+00> : vector<2x16xf32>
    %18 = vector.multi_reduction <add>, %17, %cst_5 [2] : vector<2x16x16xf32> to vector<2x16xf32>
    %19 = vector.shape_cast %18 : vector<2x16xf32> to vector<2x16x1xf32>
    %20 = tpu.reciprocal %19 : vector<2x16x1xf32> -> vector<2x16x1xf32>
    %21 = vector.broadcast %20 : vector<2x16x1xf32> to vector<2x16x16xf32>
    %22 = arith.mulf %17, %21 : vector<2x16x16xf32>
    %cst_6 = arith.constant dense<0.000000e+00> : vector<2x16x16xf32>
    %23 = tpu.matmul %22, %11, %cst_6 {dimension_numbers = #tpu.dot_dimension_numbers<[2], [1], [1], [2], [0, 0, 0, 1, 1, 2], [0], [0]>} : vector<2x16x16xf32>, vector<2x16x16xf32>, vector<2x16x16xf32> -> vector<2x16x16xf32>
    %24 = vector.extract_strided_slice %6 {offsets = [0, 0, 16], sizes = [2, 16, 16], strides = [1, 1, 1]} : vector<2x16x64xf32> to vector<2x16x16xf32>
    %25 = vector.extract_strided_slice %7 {offsets = [0, 0, 16], sizes = [2, 16, 16], strides = [1, 1, 1]} : vector<2x16x64xf32> to vector<2x16x16xf32>
    %26 = vector.extract_strided_slice %8 {offsets = [0, 0, 16], sizes = [2, 16, 16], strides = [1, 1, 1]} : vector<2x16x64xf32> to vector<2x16x16xf32>
    %cst_7 = arith.constant dense<0.000000e+00> : vector<2x16x16xf32>
    %27 = tpu.matmul %24, %25, %cst_7 {dimension_numbers = #tpu.dot_dimension_numbers<[2], [2], [1], [1], [0, 0, 0, 1, 1, 1], [0], [0]>} : vector<2x16x16xf32>, vector<2x16x16xf32>, vector<2x16x16xf32> -> vector<2x16x16xf32>
    %cst_8 = arith.constant dense<0xFF800000> : vector<2x16xf32>
    %28 = vector.multi_reduction <maximumf>, %27, %cst_8 [2] : vector<2x16x16xf32> to vector<2x16xf32>
    %29 = vector.shape_cast %28 : vector<2x16xf32> to vector<2x16x1xf32>
    %30 = vector.broadcast %29 : vector<2x16x1xf32> to vector<2x16x16xf32>
    %31 = arith.subf %27, %30 : vector<2x16x16xf32>
    %32 = math.exp %31 : vector<2x16x16xf32>
    %cst_9 = arith.constant dense<0.000000e+00> : vector<2x16xf32>
    %33 = vector.multi_reduction <add>, %32, %cst_9 [2] : vector<2x16x16xf32> to vector<2x16xf32>
    %34 = vector.shape_cast %33 : vector<2x16xf32> to vector<2x16x1xf32>
    %35 = tpu.reciprocal %34 : vector<2x16x1xf32> -> vector<2x16x1xf32>
    %36 = vector.broadcast %35 : vector<2x16x1xf32> to vector<2x16x16xf32>
    %37 = arith.mulf %32, %36 : vector<2x16x16xf32>
    %cst_10 = arith.constant dense<0.000000e+00> : vector<2x16x16xf32>
    %38 = tpu.matmul %37, %26, %cst_10 {dimension_numbers = #tpu.dot_dimension_numbers<[2], [1], [1], [2], [0, 0, 0, 1, 1, 2], [0], [0]>} : vector<2x16x16xf32>, vector<2x16x16xf32>, vector<2x16x16xf32> -> vector<2x16x16xf32>
    %39 = vector.extract_strided_slice %6 {offsets = [0, 0, 32], sizes = [2, 16, 16], strides = [1, 1, 1]} : vector<2x16x64xf32> to vector<2x16x16xf32>
    %40 = vector.extract_strided_slice %7 {offsets = [0, 0, 32], sizes = [2, 16, 16], strides = [1, 1, 1]} : vector<2x16x64xf32> to vector<2x16x16xf32>
    %41 = vector.extract_strided_slice %8 {offsets = [0, 0, 32], sizes = [2, 16, 16], strides = [1, 1, 1]} : vector<2x16x64xf32> to vector<2x16x16xf32>
    %cst_11 = arith.constant dense<0.000000e+00> : vector<2x16x16xf32>
    %42 = tpu.matmul %39, %40, %cst_11 {dimension_numbers = #tpu.dot_dimension_numbers<[2], [2], [1], [1], [0, 0, 0, 1, 1, 1], [0], [0]>} : vector<2x16x16xf32>, vector<2x16x16xf32>, vector<2x16x16xf32> -> vector<2x16x16xf32>
    %cst_12 = arith.constant dense<0xFF800000> : vector<2x16xf32>
    %43 = vector.multi_reduction <maximumf>, %42, %cst_12 [2] : vector<2x16x16xf32> to vector<2x16xf32>
    %44 = vector.shape_cast %43 : vector<2x16xf32> to vector<2x16x1xf32>
    %45 = vector.broadcast %44 : vector<2x16x1xf32> to vector<2x16x16xf32>
    %46 = arith.subf %42, %45 : vector<2x16x16xf32>
    %47 = math.exp %46 : vector<2x16x16xf32>
    %cst_13 = arith.constant dense<0.000000e+00> : vector<2x16xf32>
    %48 = vector.multi_reduction <add>, %47, %cst_13 [2] : vector<2x16x16xf32> to vector<2x16xf32>
    %49 = vector.shape_cast %48 : vector<2x16xf32> to vector<2x16x1xf32>
    %50 = tpu.reciprocal %49 : vector<2x16x1xf32> -> vector<2x16x1xf32>
    %51 = vector.broadcast %50 : vector<2x16x1xf32> to vector<2x16x16xf32>
    %52 = arith.mulf %47, %51 : vector<2x16x16xf32>
    %cst_14 = arith.constant dense<0.000000e+00> : vector<2x16x16xf32>
    %53 = tpu.matmul %52, %41, %cst_14 {dimension_numbers = #tpu.dot_dimension_numbers<[2], [1], [1], [2], [0, 0, 0, 1, 1, 2], [0], [0]>} : vector<2x16x16xf32>, vector<2x16x16xf32>, vector<2x16x16xf32> -> vector<2x16x16xf32>
    %54 = vector.extract_strided_slice %6 {offsets = [0, 0, 48], sizes = [2, 16, 16], strides = [1, 1, 1]} : vector<2x16x64xf32> to vector<2x16x16xf32>
    %55 = vector.extract_strided_slice %7 {offsets = [0, 0, 48], sizes = [2, 16, 16], strides = [1, 1, 1]} : vector<2x16x64xf32> to vector<2x16x16xf32>
    %56 = vector.extract_strided_slice %8 {offsets = [0, 0, 48], sizes = [2, 16, 16], strides = [1, 1, 1]} : vector<2x16x64xf32> to vector<2x16x16xf32>
    %cst_15 = arith.constant dense<0.000000e+00> : vector<2x16x16xf32>
    %57 = tpu.matmul %54, %55, %cst_15 {dimension_numbers = #tpu.dot_dimension_numbers<[2], [2], [1], [1], [0, 0, 0, 1, 1, 1], [0], [0]>} : vector<2x16x16xf32>, vector<2x16x16xf32>, vector<2x16x16xf32> -> vector<2x16x16xf32>
    %cst_16 = arith.constant dense<0xFF800000> : vector<2x16xf32>
    %58 = vector.multi_reduction <maximumf>, %57, %cst_16 [2] : vector<2x16x16xf32> to vector<2x16xf32>
    %59 = vector.shape_cast %58 : vector<2x16xf32> to vector<2x16x1xf32>
    %60 = vector.broadcast %59 : vector<2x16x1xf32> to vector<2x16x16xf32>
    %61 = arith.subf %57, %60 : vector<2x16x16xf32>
    %62 = math.exp %61 : vector<2x16x16xf32>
    %cst_17 = arith.constant dense<0.000000e+00> : vector<2x16xf32>
    %63 = vector.multi_reduction <add>, %62, %cst_17 [2] : vector<2x16x16xf32> to vector<2x16xf32>
    %64 = vector.shape_cast %63 : vector<2x16xf32> to vector<2x16x1xf32>
    %65 = tpu.reciprocal %64 : vector<2x16x1xf32> -> vector<2x16x1xf32>
    %66 = vector.broadcast %65 : vector<2x16x1xf32> to vector<2x16x16xf32>
    %67 = arith.mulf %62, %66 : vector<2x16x16xf32>
    %cst_18 = arith.constant dense<0.000000e+00> : vector<2x16x16xf32>
    %68 = tpu.matmul %67, %56, %cst_18 {dimension_numbers = #tpu.dot_dimension_numbers<[2], [1], [1], [2], [0, 0, 0, 1, 1, 2], [0], [0]>} : vector<2x16x16xf32>, vector<2x16x16xf32>, vector<2x16x16xf32> -> vector<2x16x16xf32>
    %69 = tpu.concatenate %23, %38, %53, %68 in 2 : vector<2x16x16xf32>, vector<2x16x16xf32>, vector<2x16x16xf32>, vector<2x16x16xf32> -> vector<2x16x64xf32>
    %70 = vector.shape_cast %69 : vector<2x16x64xf32> to vector<32x64xf32>
    %c0_19 = arith.constant 0 : index
    %c0_20 = arith.constant 0 : index
    %71 = vector.load %arg3[%c0_19, %c0_20] : memref<64x64xf32, #tpu.memory_space<vmem>>, vector<64x64xf32>
    %cst_21 = arith.constant dense<0.000000e+00> : vector<32x64xf32>
    %72 = tpu.matmul %70, %71, %cst_21 {dimension_numbers = #tpu.dot_dimension_numbers<[1], [0], [0], [1], [0, 0, 1, 1], [], []>} : vector<32x64xf32>, vector<64x64xf32>, vector<32x64xf32> -> vector<32x64xf32>
    %c0_22 = arith.constant 0 : index
    %c0_23 = arith.constant 0 : index
    %73 = vector.load %arg6[%c0_22, %c0_23] : memref<8x128xf32, #tpu.memory_space<vmem>>, vector<8x128xf32>
    %74 = vector.extract_strided_slice %73 {offsets = [0, 0], sizes = [1, 64], strides = [1, 1]} : vector<8x128xf32> to vector<1x64xf32>
    %75 = vector.extract_strided_slice %73 {offsets = [1, 0], sizes = [1, 64], strides = [1, 1]} : vector<8x128xf32> to vector<1x64xf32>
    %76 = vector.extract_strided_slice %73 {offsets = [2, 0], sizes = [1, 128], strides = [1, 1]} : vector<8x128xf32> to vector<1x128xf32>
    %77 = vector.extract_strided_slice %73 {offsets = [3, 0], sizes = [1, 64], strides = [1, 1]} : vector<8x128xf32> to vector<1x64xf32>
    %78 = vector.extract_strided_slice %73 {offsets = [4, 0], sizes = [1, 64], strides = [1, 1]} : vector<8x128xf32> to vector<1x64xf32>
    %79 = vector.extract_strided_slice %73 {offsets = [5, 0], sizes = [1, 64], strides = [1, 1]} : vector<8x128xf32> to vector<1x64xf32>
    %80 = arith.addf %72, %0 : vector<32x64xf32>
    %cst_24 = arith.constant dense<0.000000e+00> : vector<32xf32>
    %81 = vector.multi_reduction <add>, %80, %cst_24 [1] : vector<32x64xf32> to vector<32xf32>
    %82 = vector.shape_cast %81 : vector<32xf32> to vector<32x1xf32>
    %cst_25 = arith.constant 6.400000e+01 : f32
    %83 = vector.broadcast %cst_25 : f32 to vector<32x1xf32>
    %84 = arith.divf %82, %83 : vector<32x1xf32>
    %85 = vector.broadcast %84 : vector<32x1xf32> to vector<32x64xf32>
    %86 = arith.subf %80, %85 : vector<32x64xf32>
    %87 = arith.mulf %86, %86 : vector<32x64xf32>
    %cst_26 = arith.constant dense<0.000000e+00> : vector<32xf32>
    %88 = vector.multi_reduction <add>, %87, %cst_26 [1] : vector<32x64xf32> to vector<32xf32>
    %89 = vector.shape_cast %88 : vector<32xf32> to vector<32x1xf32>
    %cst_27 = arith.constant 6.400000e+01 : f32
    %90 = vector.broadcast %cst_27 : f32 to vector<32x1xf32>
    %91 = arith.divf %89, %90 : vector<32x1xf32>
    %cst_28 = arith.constant 9.99999974E-6 : f32
    %92 = vector.broadcast %cst_28 : f32 to vector<32x1xf32>
    %93 = arith.addf %91, %92 : vector<32x1xf32>
    %94 = math.rsqrt %93 : vector<32x1xf32>
    %95 = vector.broadcast %84 : vector<32x1xf32> to vector<32x64xf32>
    %96 = arith.subf %80, %95 : vector<32x64xf32>
    %97 = vector.broadcast %94 : vector<32x1xf32> to vector<32x64xf32>
    %98 = arith.mulf %96, %97 : vector<32x64xf32>
    %99 = vector.broadcast %74 : vector<1x64xf32> to vector<32x64xf32>
    %100 = arith.mulf %98, %99 : vector<32x64xf32>
    %101 = vector.broadcast %75 : vector<1x64xf32> to vector<32x64xf32>
    %102 = arith.addf %100, %101 : vector<32x64xf32>
    %c0_29 = arith.constant 0 : index
    %c0_30 = arith.constant 0 : index
    %103 = vector.load %arg4[%c0_29, %c0_30] : memref<64x128xf32, #tpu.memory_space<vmem>>, vector<64x128xf32>
    %cst_31 = arith.constant dense<0.000000e+00> : vector<32x128xf32>
    %104 = tpu.matmul %102, %103, %cst_31 {dimension_numbers = #tpu.dot_dimension_numbers<[1], [0], [0], [1], [0, 0, 1, 1], [], []>} : vector<32x64xf32>, vector<64x128xf32>, vector<32x128xf32> -> vector<32x128xf32>
    %105 = vector.broadcast %76 : vector<1x128xf32> to vector<32x128xf32>
    %106 = arith.addf %104, %105 : vector<32x128xf32>
    %cst_32 = arith.constant 0.000000e+00 : f32
    %107 = vector.broadcast %cst_32 : f32 to vector<32x128xf32>
    %108 = arith.maximumf %106, %107 : vector<32x128xf32>
    %c0_33 = arith.constant 0 : index
    %c0_34 = arith.constant 0 : index
    %109 = vector.load %arg5[%c0_33, %c0_34] : memref<128x64xf32, #tpu.memory_space<vmem>>, vector<128x64xf32>
    %cst_35 = arith.constant dense<0.000000e+00> : vector<32x64xf32>
    %110 = tpu.matmul %108, %109, %cst_35 {dimension_numbers = #tpu.dot_dimension_numbers<[1], [0], [0], [1], [0, 0, 1, 1], [], []>} : vector<32x128xf32>, vector<128x64xf32>, vector<32x64xf32> -> vector<32x64xf32>
    %111 = vector.broadcast %77 : vector<1x64xf32> to vector<32x64xf32>
    %112 = arith.addf %110, %111 : vector<32x64xf32>
    %113 = arith.addf %112, %102 : vector<32x64xf32>
    %cst_36 = arith.constant dense<0.000000e+00> : vector<32xf32>
    %114 = vector.multi_reduction <add>, %113, %cst_36 [1] : vector<32x64xf32> to vector<32xf32>
    %115 = vector.shape_cast %114 : vector<32xf32> to vector<32x1xf32>
    %cst_37 = arith.constant 6.400000e+01 : f32
    %116 = vector.broadcast %cst_37 : f32 to vector<32x1xf32>
    %117 = arith.divf %115, %116 : vector<32x1xf32>
    %118 = vector.broadcast %117 : vector<32x1xf32> to vector<32x64xf32>
    %119 = arith.subf %113, %118 : vector<32x64xf32>
    %120 = arith.mulf %119, %119 : vector<32x64xf32>
    %cst_38 = arith.constant dense<0.000000e+00> : vector<32xf32>
    %121 = vector.multi_reduction <add>, %120, %cst_38 [1] : vector<32x64xf32> to vector<32xf32>
    %122 = vector.shape_cast %121 : vector<32xf32> to vector<32x1xf32>
    %cst_39 = arith.constant 6.400000e+01 : f32
    %123 = vector.broadcast %cst_39 : f32 to vector<32x1xf32>
    %124 = arith.divf %122, %123 : vector<32x1xf32>
    %cst_40 = arith.constant 9.99999974E-6 : f32
    %125 = vector.broadcast %cst_40 : f32 to vector<32x1xf32>
    %126 = arith.addf %124, %125 : vector<32x1xf32>
    %127 = math.rsqrt %126 : vector<32x1xf32>
    %128 = vector.broadcast %117 : vector<32x1xf32> to vector<32x64xf32>
    %129 = arith.subf %113, %128 : vector<32x64xf32>
    %130 = vector.broadcast %127 : vector<32x1xf32> to vector<32x64xf32>
    %131 = arith.mulf %129, %130 : vector<32x64xf32>
    %132 = vector.broadcast %78 : vector<1x64xf32> to vector<32x64xf32>
    %133 = arith.mulf %131, %132 : vector<32x64xf32>
    %134 = vector.broadcast %79 : vector<1x64xf32> to vector<32x64xf32>
    %135 = arith.addf %133, %134 : vector<32x64xf32>
    %c0_41 = arith.constant 0 : index
    %c0_42 = arith.constant 0 : index
    %136 = vector.load %arg7[%c0_41, %c0_42] : memref<32x64xf32, #tpu.memory_space<vmem>>, vector<32x64xf32>
    tpu.vector_store %arg7[%c0_41, %c0_42], %135 {strides = array<i32>} : memref<32x64xf32, #tpu.memory_space<vmem>>, vector<32x64xf32>,
    return
  }
  func.func @transform_0(%arg0: i32) -> (i32, i32) {
    %c0_i32 = arith.constant 0 : i32
    %c0_i32_0 = arith.constant 0 : i32
    %c0_i32_1 = arith.constant 0 : i32
    return %c0_i32, %c0_i32_0 : i32, i32
  }
  func.func @transform_1(%arg0: i32) -> (i32, i32) {
    %c0_i32 = arith.constant 0 : i32
    %c0_i32_0 = arith.constant 0 : i32
    %c0_i32_1 = arith.constant 0 : i32
    return %c0_i32, %c0_i32_0 : i32, i32
  }
  func.func @transform_2(%arg0: i32) -> (i32, i32) {
    %c0_i32 = arith.constant 0 : i32
    %c0_i32_0 = arith.constant 0 : i32
    %c0_i32_1 = arith.constant 0 : i32
    return %c0_i32, %c0_i32_0 : i32, i32
  }
  func.func @transform_3(%arg0: i32) -> (i32, i32) {
    %c0_i32 = arith.constant 0 : i32
    %c0_i32_0 = arith.constant 0 : i32
    %c0_i32_1 = arith.constant 0 : i32
    return %c0_i32, %c0_i32_0 : i32, i32
  }
  func.func @transform_4(%arg0: i32) -> (i32, i32) {
    %c0_i32 = arith.constant 0 : i32
    %c0_i32_0 = arith.constant 0 : i32
    %c0_i32_1 = arith.constant 0 : i32
    return %c0_i32, %c0_i32_0 : i32, i32
  }
  func.func @transform_5(%arg0: i32) -> (i32, i32) {
    %c0_i32 = arith.constant 0 : i32
    %c0_i32_0 = arith.constant 0 : i32
    %c0_i32_1 = arith.constant 0 : i32
    return %c0_i32, %c0_i32_0 : i32, i32
  }
  func.func @transform_6(%arg0: i32) -> (i32, i32) {
    %c0_i32 = arith.constant 0 : i32
    %c0_i32_0 = arith.constant 0 : i32
    %c0_i32_1 = arith.constant 0 : i32
    return %c0_i32, %c0_i32_0 : i32, i32
  }
}

</mosaic_0001>

<llo_original>
// kernel: tpu_custom_call.1
$region0: #{tpu_custom_call.1}
  #allocation0 [shape = 'u32[]', space=smem, size = 0x4, offset = 0x4, fixed_abs, tag = 'smem constant byte address 0x4 - core index']
  #allocation1 [shape = 'u32[72,128]{1,0:T(1,128)}', space=vmem, size = 0x9000, scoped, tag = 'internal scratch']
  %s0 = inlined_call_operand.hbm [shape: f32[32,64], index: 0, kind: input, shape index: {}]
  %s1 = inlined_call_operand.vmem [shape: f32[64,192], index: 1, kind: input, shape index: {}]
  %s2 = inlined_call_operand.vmem [shape: f32[64,64], index: 2, kind: input, shape index: {}]
  %s3 = inlined_call_operand.hbm [shape: f32[64,128], index: 3, kind: input, shape index: {}]
  %s4 = inlined_call_operand.vmem [shape: f32[128,64], index: 4, kind: input, shape index: {}]
  %s5 = inlined_call_operand.hbm [shape: f32[8,128], index: 5, kind: input, shape index: {}]
  %s6 = inlined_call_operand.hbm [shape: f32[32,64], index: 6, kind: output, shape index: {}]
  %s7 = sld [smem:[#allocation0]]
  $region46: #{tpu_custom_call.1} parent=0
    _
  %s9 = ssub.s32 1, %s7
  %s10 = scalar_select 0, %s9, %s7
  $region1: #{tpu_custom_call.1} parent=0
    #allocation2 [shape = 'u8[16384]{0}', space=vmem, size = 0x4000, scoped, tag = 'input window, operand 0, single buffered']
    #allocation3 [shape = 's32[1]{0}', space=sflag, size = 0x4, scoped, tag = 'scoped memory for tpu_custom_call.1']
    #allocation4 [shape = 's32[1]{0}', space=sflag, size = 0x4, scoped, tag = 'scoped memory for tpu_custom_call.1']
    #allocation5 [shape = 'u8[32768]{0}', space=vmem, size = 0x8000, scoped, tag = 'input window, operand 3, single buffered']
    #allocation6 [shape = 's32[1]{0}', space=sflag, size = 0x4, scoped, tag = 'scoped memory for tpu_custom_call.1']
    #allocation7 [shape = 'u8[4096]{0}', space=vmem, size = 0x1000, scoped, tag = 'input window, operand 5, single buffered']
    #allocation8 [shape = 'u8[16384]{0}', space=vmem, size = 0x4000, scoped, tag = 'output window, operand 0, single buffered']
    %11 = vsyncpa [#allocation3], 0
    %12 = vsyncpa [#allocation6], 0
    %13 = vsyncpa [#allocation4], 0
    // Predicated region
    $region2: #{tpu_custom_call.1} parent=1 // pred_check
      _
    $region3: #{tpu_custom_call.1} parent=1 // pred_check_branch
      %15 = sbr.rel (0) target = $region5
    $region4: #{tpu_custom_call.1} parent=1 // pred_region
      %17 = vsyncadd [#allocation3], 0
      %s18 = sshll.u32 %s0, 4
      %s19 = int_to_ptr.hbm [resolvable:$true] %s18
      %s20 = sshll.u32 [#allocation2], 4
      %s21 = int_to_ptr.vmem [resolvable:$true] %s20
      %26 = dma.hbm_to_vmem [thread:$0]  %s19, 512, %s21, [#allocation3], 128, 128, 8
    $region5: #{tpu_custom_call.1} parent=1 // pred_fallthru
      _
    // Predicated region
    $region6: #{tpu_custom_call.1} parent=1 // pred_check
      _
    $region7: #{tpu_custom_call.1} parent=1 // pred_check_branch
      %28 = sbr.rel (0) target = $region9
    $region8: #{tpu_custom_call.1} parent=1 // pred_region
      _
    $region9: #{tpu_custom_call.1} parent=1 // pred_fallthru
      _
    // Predicated region
    $region10: #{tpu_custom_call.1} parent=1 // pred_check
      _
    $region11: #{tpu_custom_call.1} parent=1 // pred_check_branch
      %30 = sbr.rel (0) target = $region13
    $region12: #{tpu_custom_call.1} parent=1 // pred_region
      _
    $region13: #{tpu_custom_call.1} parent=1 // pred_fallthru
      _
    // Predicated region
    $region14: #{tpu_custom_call.1} parent=1 // pred_check
      _
    $region15: #{tpu_custom_call.1} parent=1 // pred_check_branch
      %32 = sbr.rel (0) target = $region17
    $region16: #{tpu_custom_call.1} parent=1 // pred_region
      %34 = vsyncadd [#allocation6], 0
      %s35 = sshll.u32 %s3, 4
      %s36 = int_to_ptr.hbm [resolvable:$true] %s35
      %s37 = sshll.u32 [#allocation5], 4
      %s38 = int_to_ptr.vmem [resolvable:$true] %s37
      %43 = dma.hbm_to_vmem [thread:$0]  %s36, 1024, %s38, [#allocation6], 128, 128, 8
    $region17: #{tpu_custom_call.1} parent=1 // pred_fallthru
      _
    // Predicated region
    $region18: #{tpu_custom_call.1} parent=1 // pred_check
      _
    $region19: #{tpu_custom_call.1} parent=1 // pred_check_branch
      %45 = sbr.rel (0) target = $region21
    $region20: #{tpu_custom_call.1} parent=1 // pred_region
      _
    $region21: #{tpu_custom_call.1} parent=1 // pred_fallthru
      _
    // Predicated region
    $region22: #{tpu_custom_call.1} parent=1 // pred_check
      _
    $region23: #{tpu_custom_call.1} parent=1 // pred_check_branch
      %47 = sbr.rel (0) target = $region25
    $region24: #{tpu_custom_call.1} parent=1 // pred_region
      %49 = vsyncadd [#allocation6], 0
      %s51 = sshll.u32 %s5, 4
      %s52 = int_to_ptr.hbm [resolvable:$true] %s51
      %s53 = sshll.u32 [#allocation7], 4
      %s54 = int_to_ptr.vmem [resolvable:$true] %s53
      %56 = dma.hbm_to_vmem [thread:$0]  %s52, 128, %s54, [#allocation6]
    $region25: #{tpu_custom_call.1} parent=1 // pred_fallthru
      _
    // Predicated region
    $region26: #{tpu_custom_call.1} parent=1 // pred_check
      _
    $region27: #{tpu_custom_call.1} parent=1 // pred_check_branch
      %58 = sbr.rel (0) target = $region29
    $region28: #{tpu_custom_call.1} parent=1 // pred_region
      %60 = dma.done [#allocation3], 512
    $region29: #{tpu_custom_call.1} parent=1 // pred_fallthru
      _
    // Predicated region
    $region30: #{tpu_custom_call.1} parent=1 // pred_check
      _
    $region31: #{tpu_custom_call.1} parent=1 // pred_check_branch
      %62 = sbr.rel (0) target = $region33
    $region32: #{tpu_custom_call.1} parent=1 // pred_region
      %64 = dma.done [#allocation6], 1024
    $region33: #{tpu_custom_call.1} parent=1 // pred_fallthru
      _
    // Predicated region
    $region34: #{tpu_custom_call.1} parent=1 // pred_check
      _
    $region35: #{tpu_custom_call.1} parent=1 // pred_check_branch
      %66 = sbr.rel (0) target = $region37
    $region36: #{tpu_custom_call.1} parent=1 // pred_region
      %68 = dma.done [#allocation6], 128
    $region37: #{tpu_custom_call.1} parent=1 // pred_fallthru
      _
    %v69 = vld [vmem:[#allocation2] sm:$0xff]
    %v70 = vld [vmem:[#allocation2 + $0x8] sm:$0xff]
    %v71 = vld [vmem:[#allocation2 + $0x10] sm:$0xff]
    %v72 = vld [vmem:[#allocation2 + $0x18] sm:$0xff]
    %v73 = vld [vmem:[%s1] sm:$0xff]
    %v74 = vld [vmem:[%s1 + $0x8] sm:$0xff]
    %v75 = vld [vmem:[%s1 + $0x10] sm:$0xff]
    %v76 = vld [vmem:[%s1 + $0x18] sm:$0xff]
    %v77 = vld [vmem:[%s1 + $0x20] sm:$0xff]
    %v78 = vld [vmem:[%s1 + $0x28] sm:$0xff]
    %v79 = vld [vmem:[%s1 + $0x30] sm:$0xff]
    %v80 = vld [vmem:[%s1 + $0x38] sm:$0xff]
    %v81 = vld [vmem:[%s1 + $0x40] sm:$0xff]
    %v82 = vld [vmem:[%s1 + $0x48] sm:$0xff]
    %v83 = vld [vmem:[%s1 + $0x50] sm:$0xff]
    %v84 = vld [vmem:[%s1 + $0x58] sm:$0xff]
    %v85 = vld [vmem:[%s1 + $0x60] sm:$0xff]
    %v86 = vld [vmem:[%s1 + $0x68] sm:$0xff]
    %v87 = vld [vmem:[%s1 + $0x70] sm:$0xff]
    %v88 = vld [vmem:[%s1 + $0x78] sm:$0xff]
    %vm89 = vcmask 523264
    %v91 = vsel %vm89, %v69, 0
    %v94 = vsel %vm89, %v70, 0
    %v97 = vsel %vm89, %v71, 0
    %v100 = vsel %vm89, %v72, 0
    %102 = vmatpush.msra.mxu0 0.0
    %103 = vmatpush.msra.mxu0 0.0
    %104 = vmatpush.msra.mxu0 0.0
    %105 = vmatpush.msra.mxu0 0.0
    %106 = vmatpush.msra.mxu0 0.0
    %107 = vmatpush.msra.mxu0 0.0
    %108 = vmatpush.msra.mxu0 0.0
    %109 = vmatpush.msra.mxu0 0.0
    %110 = vmatpush.msra.mxu0 %v87
    %111 = vmatpush.msra.mxu0 %v85
    %112 = vmatpush.msra.mxu0 %v83
    %113 = vmatpush.msra.mxu0 %v81
    %114 = vmatpush.msra.mxu0 %v79
    %115 = vmatpush.msra.mxu0 %v77
    %116 = vmatpush.msra.mxu0 %v75
    %117 = vmatpush.msra.mxu0 %v73
    %118 = vmatmul.f32.gmra.mxu0 %v91
    %v119 = vpop.f32.mrf.mxu0
    %v120 = vadd.f32 0.0, %v119
    %121 = vmatmul.f32.gmra.mxu0 %v94
    %v122 = vpop.f32.mrf.mxu0
    %v123 = vadd.f32 0.0, %v122
    %124 = vmatmul.f32.gmra.mxu0 %v97
    %v125 = vpop.f32.mrf.mxu0
    %v126 = vadd.f32 0.0, %v125
    %127 = vmatmul.f32.gmra.mxu0 %v100
    %v128 = vpop.f32.mrf.mxu0
    %v129 = vadd.f32 0.0, %v128
    %130 = vdwg.mxu0
    %131 = vmatpush.msra.mxu0 0.0
    %132 = vmatpush.msra.mxu0 0.0
    %133 = vmatpush.msra.mxu0 0.0
    %134 = vmatpush.msra.mxu0 0.0
    %135 = vmatpush.msra.mxu0 0.0
    %136 = vmatpush.msra.mxu0 0.0
    %137 = vmatpush.msra.mxu0 0.0
    %138 = vmatpush.msra.mxu0 0.0
    %139 = vmatpush.msra.mxu0 %v88
    %140 = vmatpush.msra.mxu0 %v86
    %141 = vmatpush.msra.mxu0 %v84
    %142 = vmatpush.msra.mxu0 %v82
    %143 = vmatpush.msra.mxu0 %v80
    %144 = vmatpush.msra.mxu0 %v78
    %145 = vmatpush.msra.mxu0 %v76
    %146 = vmatpush.msra.mxu0 %v74
    %147 = vmatmul.f32.gmra.mxu0 %v91
    %v148 = vpop.f32.mrf.mxu0
    %v149 = vadd.f32 0.0, %v148
    %150 = vmatmul.f32.gmra.mxu0 %v94
    %v151 = vpop.f32.mrf.mxu0
    %v152 = vadd.f32 0.0, %v151
    %153 = vmatmul.f32.gmra.mxu0 %v97
    %v154 = vpop.f32.mrf.mxu0
    %v155 = vadd.f32 0.0, %v154
    %156 = vmatmul.f32.gmra.mxu0 %v100
    %v157 = vpop.f32.mrf.mxu0
    %v158 = vadd.f32 0.0, %v157
    %159 = vdwg.mxu0
    %162 = vrot.lane.b32.xlu0 %v120, 64
    %v163 = vpop.permute.xlu0 %162
    %164 = vrot.lane.b32.xlu0 %v123, 64
    %v165 = vpop.permute.xlu0 %164
    %vm166 = vcmask 130048
    %v167 = vsel %vm166, %v120, 0
    %v169 = vsel %vm166, %v123, 0
    %v171 = vsel %vm166, %v163, 0
    %v173 = vsel %vm166, %v165, 0
    %175 = vmatpush.xpose.msra.mxu0 0.0
    %176 = vmatpush.xpose.msra.mxu0 0.0
    %177 = vmatpush.xpose.msra.mxu0 0.0
    %178 = vmatpush.xpose.msra.mxu0 0.0
    %179 = vmatpush.xpose.msra.mxu0 0.0
    %180 = vmatpush.xpose.msra.mxu0 0.0
    %181 = vmatpush.xpose.msra.mxu0 0.0
    %182 = vmatpush.xpose.msra.mxu0 0.0
    %183 = vmatpush.xpose.msra.mxu0 0.0
    %184 = vmatpush.xpose.msra.mxu0 0.0
    %185 = vmatpush.xpose.msra.mxu0 0.0
    %186 = vmatpush.xpose.msra.mxu0 0.0
    %187 = vmatpush.xpose.msra.mxu0 0.0
    %188 = vmatpush.xpose.msra.mxu0 0.0
    %189 = vmatpush.xpose.msra.mxu0 %v173
    %190 = vmatpush.xpose.msra.mxu0 %v171
    %191 = vmatmul.f32.gmra.mxu0 %v167
    %v192 = vpop.f32.mrf.mxu0
    %v193 = vadd.f32 0.0, %v192
    %194 = vmatmul.f32.gmra.mxu0 %v169
    %v195 = vpop.f32.mrf.mxu0
    %v196 = vadd.f32 0.0, %v195
    %197 = vdwg.mxu0
    %200 = vrot.lane.b32.xlu0 %v126, 64
    %v201 = vpop.permute.xlu0 %200
    %202 = vrot.lane.b32.xlu0 %v129, 64
    %v203 = vpop.permute.xlu0 %202
    %v204 = vsel %vm166, %v126, 0
    %v206 = vsel %vm166, %v129, 0
    %v208 = vsel %vm166, %v201, 0
    %v210 = vsel %vm166, %v203, 0
    %212 = vmatpush.xpose.msra.mxu0 0.0
    %213 = vmatpush.xpose.msra.mxu0 0.0
    %214 = vmatpush.xpose.msra.mxu0 0.0
    %215 = vmatpush.xpose.msra.mxu0 0.0
    %216 = vmatpush.xpose.msra.mxu0 0.0
    %217 = vmatpush.xpose.msra.mxu0 0.0
    %218 = vmatpush.xpose.msra.mxu0 0.0
    %219 = vmatpush.xpose.msra.mxu0 0.0
    %220 = vmatpush.xpose.msra.mxu0 0.0
    %221 = vmatpush.xpose.msra.mxu0 0.0
    %222 = vmatpush.xpose.msra.mxu0 0.0
    %223 = vmatpush.xpose.msra.mxu0 0.0
    %224 = vmatpush.xpose.msra.mxu0 0.0
    %225 = vmatpush.xpose.msra.mxu0 0.0
    %226 = vmatpush.xpose.msra.mxu0 %v210
    %227 = vmatpush.xpose.msra.mxu0 %v208
    %228 = vmatmul.f32.gmra.mxu0 %v204
    %v229 = vpop.f32.mrf.mxu0
    %v230 = vadd.f32 0.0, %v229
    %231 = vmatmul.f32.gmra.mxu0 %v206
    %v232 = vpop.f32.mrf.mxu0
    %v233 = vadd.f32 0.0, %v232
    %234 = vdwg.mxu0
    %v235 = vsel %vm166, %v193, -inf
    %236 = vmax.xlane.f32.xlu0 %v235
    %v237 = vpop.xlane.xlu0 %236
    %v238 = vsel %vm166, %v196, -inf
    %239 = vmax.xlane.f32.xlu0 %v238
    %v240 = vpop.xlane.xlu0 %239
    %v241 = vsel %vm166, %v230, -inf
    %242 = vmax.xlane.f32.xlu0 %v241
    %v243 = vpop.xlane.xlu0 %242
    %v244 = vsel %vm166, %v233, -inf
    %245 = vmax.xlane.f32.xlu0 %v244
    %v246 = vpop.xlane.xlu0 %245
    %v247 = vsub.f32 %v193, %v237
    %v248 = vsub.f32 %v196, %v240
    %v249 = vsub.f32 %v230, %v243
    %v250 = vsub.f32 %v233, %v246
    %v251 = vmul.f32 %v247, 1.442695
    %v252 = vpow.pop %v251
    %v253 = vmul.f32 %v248, 1.442695
    %v254 = vpow.pop %v253
    %v255 = vmul.f32 %v249, 1.442695
    %v256 = vpow.pop %v255
    %v257 = vmul.f32 %v250, 1.442695
    %v258 = vpow.pop %v257
    %v259 = vsel %vm166, %v252, 0.0
    %260 = vadd.xlane.f32.xlu0 %v259
    %v261 = vpop.xlane.xlu0 %260
    %v262 = vsel %vm166, %v254, 0.0
    %263 = vadd.xlane.f32.xlu0 %v262
    %v264 = vpop.xlane.xlu0 %263
    %v265 = vsel %vm166, %v256, 0.0
    %266 = vadd.xlane.f32.xlu0 %v265
    %v267 = vpop.xlane.xlu0 %266
    %v268 = vsel %vm166, %v258, 0.0
    %269 = vadd.xlane.f32.xlu0 %v268
    %v270 = vpop.xlane.xlu0 %269
    %v271 = vrcp.pop %v261
    %v272 = vmul.f32 %v261, %v271
    %v273 = vsub.f32 1.0, %v272
    %v274 = vmul.f32 %v271, %v273
    %v275 = vadd.f32 %v271, %v274
    %vm276 = vweird.f32 %v261
    %vm277 = vweird.f32 %v271
    %vm278 = vmor %vm276, %vm277
    %v279 = vsel %vm278, %v271, %v275
    %v280 = vand.u32 2147483647, %v261
    %vm281 = vcmp.eq.f32.partialorder %v280, 8.507059e+37
    %v282 = vand.u32 %v261, 2147483648
    %v283 = vor.u32 1.1754944e-38, %v282
    %v284 = vsel %vm281, %v283, %v279
    %v285 = vrcp.pop %v264
    %v286 = vmul.f32 %v264, %v285
    %v287 = vsub.f32 1.0, %v286
    %v288 = vmul.f32 %v285, %v287
    %v289 = vadd.f32 %v285, %v288
    %vm290 = vweird.f32 %v264
    %vm291 = vweird.f32 %v285
    %vm292 = vmor %vm290, %vm291
    %v293 = vsel %vm292, %v285, %v289
    %v294 = vand.u32 2147483647, %v264
    %vm295 = vcmp.eq.f32.partialorder %v294, 8.507059e+37
    %v296 = vand.u32 %v264, 2147483648
    %v297 = vor.u32 1.1754944e-38, %v296
    %v298 = vsel %vm295, %v297, %v293
    %v299 = vrcp.pop %v267
    %v300 = vmul.f32 %v267, %v299
    %v301 = vsub.f32 1.0, %v300
    %v302 = vmul.f32 %v299, %v301
    %v303 = vadd.f32 %v299, %v302
    %vm304 = vweird.f32 %v267
    %vm305 = vweird.f32 %v299
    %vm306 = vmor %vm304, %vm305
    %v307 = vsel %vm306, %v299, %v303
    %v308 = vand.u32 2147483647, %v267
    %vm309 = vcmp.eq.f32.partialorder %v308, 8.507059e+37
    %v310 = vand.u32 %v267, 2147483648
    %v311 = vor.u32 1.1754944e-38, %v310
    %v312 = vsel %vm309, %v311, %v307
    %v313 = vrcp.pop %v270
    %v314 = vmul.f32 %v270, %v313
    %v315 = vsub.f32 1.0, %v314
    %v316 = vmul.f32 %v313, %v315
    %v317 = vadd.f32 %v313, %v316
    %vm318 = vweird.f32 %v270
    %vm319 = vweird.f32 %v313
    %vm320 = vmor %vm318, %vm319
    %v321 = vsel %vm320, %v313, %v317
    %v322 = vand.u32 2147483647, %v270
    %vm323 = vcmp.eq.f32.partialorder %v322, 8.507059e+37
    %v324 = vand.u32 %v270, 2147483648
    %v325 = vor.u32 1.1754944e-38, %v324
    %v326 = vsel %vm323, %v325, %v321
    %v327 = vmul.f32 %v252, %v284
    %v328 = vmul.f32 %v254, %v298
    %v329 = vmul.f32 %v256, %v312
    %v330 = vmul.f32 %v258, %v326
    %v332 = vsel %vm166, %v327, 0
    %v335 = vsel %vm166, %v328, 0
    %337 = vmatpush.msra.mxu0 0.0
    %338 = vmatpush.msra.mxu0 0.0
    %339 = vmatpush.msra.mxu0 0.0
    %340 = vmatpush.msra.mxu0 0.0
    %341 = vmatpush.msra.mxu0 0.0
    %342 = vmatpush.msra.mxu0 0.0
    %343 = vmatpush.msra.mxu0 0.0
    %344 = vmatpush.msra.mxu0 0.0
    %345 = vmatpush.msra.mxu0 0.0
    %346 = vmatpush.msra.mxu0 0.0
    %347 = vmatpush.msra.mxu0 0.0
    %348 = vmatpush.msra.mxu0 0.0
    %349 = vmatpush.msra.mxu0 0.0
    %350 = vmatpush.msra.mxu0 0.0
    %351 = vmatpush.msra.mxu0 %v152
    %352 = vmatpush.msra.mxu0 %v149
    %353 = vmatmul.f32.gmra.mxu0 %v332
    %v354 = vpop.f32.mrf.mxu0
    %v355 = vadd.f32 0.0, %v354
    %356 = vmatmul.f32.gmra.mxu0 %v335
    %v357 = vpop.f32.mrf.mxu0
    %v358 = vadd.f32 0.0, %v357
    %359 = vdwg.mxu0
    %v361 = vsel %vm166, %v329, 0
    %v364 = vsel %vm166, %v330, 0
    %366 = vmatpush.msra.mxu0 0.0
    %367 = vmatpush.msra.mxu0 0.0
    %368 = vmatpush.msra.mxu0 0.0
    %369 = vmatpush.msra.mxu0 0.0
    %370 = vmatpush.msra.mxu0 0.0
    %371 = vmatpush.msra.mxu0 0.0
    %372 = vmatpush.msra.mxu0 0.0
    %373 = vmatpush.msra.mxu0 0.0
    %374 = vmatpush.msra.mxu0 0.0
    %375 = vmatpush.msra.mxu0 0.0
    %376 = vmatpush.msra.mxu0 0.0
    %377 = vmatpush.msra.mxu0 0.0
    %378 = vmatpush.msra.mxu0 0.0
    %379 = vmatpush.msra.mxu0 0.0
    %380 = vmatpush.msra.mxu0 %v158
    %381 = vmatpush.msra.mxu0 %v155
    %382 = vmatmul.f32.gmra.mxu0 %v361
    %v383 = vpop.f32.mrf.mxu0
    %v384 = vadd.f32 0.0, %v383
    %385 = vmatmul.f32.gmra.mxu0 %v364
    %v386 = vpop.f32.mrf.mxu0
    %v387 = vadd.f32 0.0, %v386
    %388 = vdwg.mxu0
    %389 = vrot.lane.b32.xlu0 %v120, 112
    %v390 = vpop.permute.xlu0 %389
    %391 = vrot.lane.b32.xlu0 %v123, 112
    %v392 = vpop.permute.xlu0 %391
    %393 = vrot.lane.b32.xlu0 %v120, 48
    %v394 = vpop.permute.xlu0 %393
    %395 = vrot.lane.b32.xlu0 %v123, 48
    %v396 = vpop.permute.xlu0 %395
    %v397 = vsel %vm166, %v390, 0
    %v399 = vsel %vm166, %v392, 0
    %v401 = vsel %vm166, %v394, 0
    %v403 = vsel %vm166, %v396, 0
    %405 = vmatpush.xpose.msra.mxu0 0.0
    %406 = vmatpush.xpose.msra.mxu0 0.0
    %407 = vmatpush.xpose.msra.mxu0 0.0
    %408 = vmatpush.xpose.msra.mxu0 0.0
    %409 = vmatpush.xpose.msra.mxu0 0.0
    %410 = vmatpush.xpose.msra.mxu0 0.0
    %411 = vmatpush.xpose.msra.mxu0 0.0
    %412 = vmatpush.xpose.msra.mxu0 0.0
    %413 = vmatpush.xpose.msra.mxu0 0.0
    %414 = vmatpush.xpose.msra.mxu0 0.0
    %415 = vmatpush.xpose.msra.mxu0 0.0
    %416 = vmatpush.xpose.msra.mxu0 0.0
    %417 = vmatpush.xpose.msra.mxu0 0.0
    %418 = vmatpush.xpose.msra.mxu0 0.0
    %419 = vmatpush.xpose.msra.mxu0 %v403
    %420 = vmatpush.xpose.msra.mxu0 %v401
    %421 = vmatmul.f32.gmra.mxu0 %v397
    %v422 = vpop.f32.mrf.mxu0
    %v423 = vadd.f32 0.0, %v422
    %424 = vmatmul.f32.gmra.mxu0 %v399
    %v425 = vpop.f32.mrf.mxu0
    %v426 = vadd.f32 0.0, %v425
    %427 = vdwg.mxu0
    %428 = vrot.lane.b32.xlu0 %v126, 112
    %v429 = vpop.permute.xlu0 %428
    %430 = vrot.lane.b32.xlu0 %v129, 112
    %v431 = vpop.permute.xlu0 %430
    %432 = vrot.lane.b32.xlu0 %v126, 48
    %v433 = vpop.permute.xlu0 %432
    %434 = vrot.lane.b32.xlu0 %v129, 48
    %v435 = vpop.permute.xlu0 %434
    %v436 = vsel %vm166, %v429, 0
    %v438 = vsel %vm166, %v431, 0
    %v440 = vsel %vm166, %v433, 0
    %v442 = vsel %vm166, %v435, 0
    %444 = vmatpush.xpose.msra.mxu0 0.0
    %445 = vmatpush.xpose.msra.mxu0 0.0
    %446 = vmatpush.xpose.msra.mxu0 0.0
    %447 = vmatpush.xpose.msra.mxu0 0.0
    %448 = vmatpush.xpose.msra.mxu0 0.0
    %449 = vmatpush.xpose.msra.mxu0 0.0
    %450 = vmatpush.xpose.msra.mxu0 0.0
    %451 = vmatpush.xpose.msra.mxu0 0.0
    %452 = vmatpush.xpose.msra.mxu0 0.0
    %453 = vmatpush.xpose.msra.mxu0 0.0
    %454 = vmatpush.xpose.msra.mxu0 0.0
    %455 = vmatpush.xpose.msra.mxu0 0.0
    %456 = vmatpush.xpose.msra.mxu0 0.0
    %457 = vmatpush.xpose.msra.mxu0 0.0
    %458 = vmatpush.xpose.msra.mxu0 %v442
    %459 = vmatpush.xpose.msra.mxu0 %v440
    %460 = vmatmul.f32.gmra.mxu0 %v436
    %v461 = vpop.f32.mrf.mxu0
    %v462 = vadd.f32 0.0, %v461
    %463 = vmatmul.f32.gmra.mxu0 %v438
    %v464 = vpop.f32.mrf.mxu0
    %v465 = vadd.f32 0.0, %v464
    %466 = vdwg.mxu0
    %v467 = vsel %vm166, %v423, -inf
    %468 = vmax.xlane.f32.xlu0 %v467
    %v469 = vpop.xlane.xlu0 %468
    %v470 = vsel %vm166, %v426, -inf
    %471 = vmax.xlane.f32.xlu0 %v470
    %v472 = vpop.xlane.xlu0 %471
    %v473 = vsel %vm166, %v462, -inf
    %474 = vmax.xlane.f32.xlu0 %v473
    %v475 = vpop.xlane.xlu0 %474
    %v476 = vsel %vm166, %v465, -inf
    %477 = vmax.xlane.f32.xlu0 %v476
    %v478 = vpop.xlane.xlu0 %477
    %v479 = vsub.f32 %v423, %v469
    %v480 = vsub.f32 %v426, %v472
    %v481 = vsub.f32 %v462, %v475
    %v482 = vsub.f32 %v465, %v478
    %v483 = vmul.f32 %v479, 1.442695
    %v484 = vpow.pop %v483
    %v485 = vmul.f32 %v480, 1.442695
    %v486 = vpow.pop %v485
    %v487 = vmul.f32 %v481, 1.442695
    %v488 = vpow.pop %v487
    %v489 = vmul.f32 %v482, 1.442695
    %v490 = vpow.pop %v489
    %v491 = vsel %vm166, %v484, 0.0
    %492 = vadd.xlane.f32.xlu0 %v491
    %v493 = vpop.xlane.xlu0 %492
    %v494 = vsel %vm166, %v486, 0.0
    %495 = vadd.xlane.f32.xlu0 %v494
    %v496 = vpop.xlane.xlu0 %495
    %v497 = vsel %vm166, %v488, 0.0
    %498 = vadd.xlane.f32.xlu0 %v497
    %v499 = vpop.xlane.xlu0 %498
    %v500 = vsel %vm166, %v490, 0.0
    %501 = vadd.xlane.f32.xlu0 %v500
    %v502 = vpop.xlane.xlu0 %501
    %v503 = vrcp.pop %v493
    %v504 = vmul.f32 %v493, %v503
    %v505 = vsub.f32 1.0, %v504
    %v506 = vmul.f32 %v503, %v505
    %v507 = vadd.f32 %v503, %v506
    %vm508 = vweird.f32 %v493
    %vm509 = vweird.f32 %v503
    %vm510 = vmor %vm508, %vm509
    %v511 = vsel %vm510, %v503, %v507
    %v512 = vand.u32 2147483647, %v493
    %vm513 = vcmp.eq.f32.partialorder %v512, 8.507059e+37
    %v514 = vand.u32 %v493, 2147483648
    %v515 = vor.u32 1.1754944e-38, %v514
    %v516 = vsel %vm513, %v515, %v511
    %v517 = vrcp.pop %v496
    %v518 = vmul.f32 %v496, %v517
    %v519 = vsub.f32 1.0, %v518
    %v520 = vmul.f32 %v517, %v519
    %v521 = vadd.f32 %v517, %v520
    %vm522 = vweird.f32 %v496
    %vm523 = vweird.f32 %v517
    %vm524 = vmor %vm522, %vm523
    %v525 = vsel %vm524, %v517, %v521
    %v526 = vand.u32 2147483647, %v496
    %vm527 = vcmp.eq.f32.partialorder %v526, 8.507059e+37
    %v528 = vand.u32 %v496, 2147483648
    %v529 = vor.u32 1.1754944e-38, %v528
    %v530 = vsel %vm527, %v529, %v525
    %v531 = vrcp.pop %v499
    %v532 = vmul.f32 %v499, %v531
    %v533 = vsub.f32 1.0, %v532
    %v534 = vmul.f32 %v531, %v533
    %v535 = vadd.f32 %v531, %v534
    %vm536 = vweird.f32 %v499
    %vm537 = vweird.f32 %v531
    %vm538 = vmor %vm536, %vm537
    %v539 = vsel %vm538, %v531, %v535
    %v540 = vand.u32 2147483647, %v499
    %vm541 = vcmp.eq.f32.partialorder %v540, 8.507059e+37
    %v542 = vand.u32 %v499, 2147483648
    %v543 = vor.u32 1.1754944e-38, %v542
    %v544 = vsel %vm541, %v543, %v539
    %v545 = vrcp.pop %v502
    %v546 = vmul.f32 %v502, %v545
    %v547 = vsub.f32 1.0, %v546
    %v548 = vmul.f32 %v545, %v547
    %v549 = vadd.f32 %v545, %v548
    %vm550 = vweird.f32 %v502
    %vm551 = vweird.f32 %v545
    %vm552 = vmor %vm550, %vm551
    %v553 = vsel %vm552, %v545, %v549
    %v554 = vand.u32 2147483647, %v502
    %vm555 = vcmp.eq.f32.partialorder %v554, 8.507059e+37
    %v556 = vand.u32 %v502, 2147483648
    %v557 = vor.u32 1.1754944e-38, %v556
    %v558 = vsel %vm555, %v557, %v553
    %v559 = vmul.f32 %v484, %v516
    %v560 = vmul.f32 %v486, %v530
    %v561 = vmul.f32 %v488, %v544
    %v562 = vmul.f32 %v490, %v558
    %565 = vrot.lane.b32.xlu0 %v149, 112
    %v566 = vpop.permute.xlu0 %565
    %567 = vrot.lane.b32.xlu0 %v152, 112
    %v568 = vpop.permute.xlu0 %567
    %v572 = vsel %vm166, %v559, 0
    %v575 = vsel %vm166, %v560, 0
    %577 = vmatpush.msra.mxu0 0.0
    %578 = vmatpush.msra.mxu0 0.0
    %579 = vmatpush.msra.mxu0 0.0
    %580 = vmatpush.msra.mxu0 0.0
    %581 = vmatpush.msra.mxu0 0.0
    %582 = vmatpush.msra.mxu0 0.0
    %583 = vmatpush.msra.mxu0 0.0
    %584 = vmatpush.msra.mxu0 0.0
    %585 = vmatpush.msra.mxu0 0.0
    %586 = vmatpush.msra.mxu0 0.0
    %587 = vmatpush.msra.mxu0 0.0
    %588 = vmatpush.msra.mxu0 0.0
    %589 = vmatpush.msra.mxu0 0.0
    %590 = vmatpush.msra.mxu0 0.0
    %591 = vmatpush.msra.mxu0 %v568
    %592 = vmatpush.msra.mxu0 %v566
    %593 = vmatmul.f32.gmra.mxu0 %v572
    %v594 = vpop.f32.mrf.mxu0
    %v595 = vadd.f32 0.0, %v594
    %596 = vmatmul.f32.gmra.mxu0 %v575
    %v597 = vpop.f32.mrf.mxu0
    %v598 = vadd.f32 0.0, %v597
    %599 = vdwg.mxu0
    %602 = vrot.lane.b32.xlu0 %v155, 112
    %v603 = vpop.permute.xlu0 %602
    %604 = vrot.lane.b32.xlu0 %v158, 112
    %v605 = vpop.permute.xlu0 %604
    %v609 = vsel %vm166, %v561, 0
    %v612 = vsel %vm166, %v562, 0
    %614 = vmatpush.msra.mxu0 0.0
    %615 = vmatpush.msra.mxu0 0.0
    %616 = vmatpush.msra.mxu0 0.0
    %617 = vmatpush.msra.mxu0 0.0
    %618 = vmatpush.msra.mxu0 0.0
    %619 = vmatpush.msra.mxu0 0.0
    %620 = vmatpush.msra.mxu0 0.0
    %621 = vmatpush.msra.mxu0 0.0
    %622 = vmatpush.msra.mxu0 0.0
    %623 = vmatpush.msra.mxu0 0.0
    %624 = vmatpush.msra.mxu0 0.0
    %625 = vmatpush.msra.mxu0 0.0
    %626 = vmatpush.msra.mxu0 0.0
    %627 = vmatpush.msra.mxu0 0.0
    %628 = vmatpush.msra.mxu0 %v605
    %629 = vmatpush.msra.mxu0 %v603
    %630 = vmatmul.f32.gmra.mxu0 %v609
    %v631 = vpop.f32.mrf.mxu0
    %v632 = vadd.f32 0.0, %v631
    %633 = vmatmul.f32.gmra.mxu0 %v612
    %v634 = vpop.f32.mrf.mxu0
    %v635 = vadd.f32 0.0, %v634
    %636 = vdwg.mxu0
    %637 = vrot.lane.b32.xlu0 %v120, 96
    %v638 = vpop.permute.xlu0 %637
    %639 = vrot.lane.b32.xlu0 %v123, 96
    %v640 = vpop.permute.xlu0 %639
    %641 = vrot.lane.b32.xlu0 %v120, 32
    %v642 = vpop.permute.xlu0 %641
    %643 = vrot.lane.b32.xlu0 %v123, 32
    %v644 = vpop.permute.xlu0 %643
    %v645 = vsel %vm166, %v638, 0
    %v647 = vsel %vm166, %v640, 0
    %v649 = vsel %vm166, %v642, 0
    %v651 = vsel %vm166, %v644, 0
    %653 = vmatpush.xpose.msra.mxu0 0.0
    %654 = vmatpush.xpose.msra.mxu0 0.0
    %655 = vmatpush.xpose.msra.mxu0 0.0
    %656 = vmatpush.xpose.msra.mxu0 0.0
    %657 = vmatpush.xpose.msra.mxu0 0.0
    %658 = vmatpush.xpose.msra.mxu0 0.0
    %659 = vmatpush.xpose.msra.mxu0 0.0
    %660 = vmatpush.xpose.msra.mxu0 0.0
    %661 = vmatpush.xpose.msra.mxu0 0.0
    %662 = vmatpush.xpose.msra.mxu0 0.0
    %663 = vmatpush.xpose.msra.mxu0 0.0
    %664 = vmatpush.xpose.msra.mxu0 0.0
    %665 = vmatpush.xpose.msra.mxu0 0.0
    %666 = vmatpush.xpose.msra.mxu0 0.0
    %667 = vmatpush.xpose.msra.mxu0 %v651
    %668 = vmatpush.xpose.msra.mxu0 %v649
    %669 = vmatmul.f32.gmra.mxu0 %v645
    %v670 = vpop.f32.mrf.mxu0
    %v671 = vadd.f32 0.0, %v670
    %672 = vmatmul.f32.gmra.mxu0 %v647
    %v673 = vpop.f32.mrf.mxu0
    %v674 = vadd.f32 0.0, %v673
    %675 = vdwg.mxu0
    %676 = vrot.lane.b32.xlu0 %v126, 96
    %v677 = vpop.permute.xlu0 %676
    %678 = vrot.lane.b32.xlu0 %v129, 96
    %v679 = vpop.permute.xlu0 %678
    %680 = vrot.lane.b32.xlu0 %v126, 32
    %v681 = vpop.permute.xlu0 %680
    %682 = vrot.lane.b32.xlu0 %v129, 32
    %v683 = vpop.permute.xlu0 %682
    %v684 = vsel %vm166, %v677, 0
    %v686 = vsel %vm166, %v679, 0
    %v688 = vsel %vm166, %v681, 0
    %v690 = vsel %vm166, %v683, 0
    %692 = vmatpush.xpose.msra.mxu0 0.0
    %693 = vmatpush.xpose.msra.mxu0 0.0
    %694 = vmatpush.xpose.msra.mxu0 0.0
    %695 = vmatpush.xpose.msra.mxu0 0.0
    %696 = vmatpush.xpose.msra.mxu0 0.0
    %697 = vmatpush.xpose.msra.mxu0 0.0
    %698 = vmatpush.xpose.msra.mxu0 0.0
    %699 = vmatpush.xpose.msra.mxu0 0.0
    %700 = vmatpush.xpose.msra.mxu0 0.0
    %701 = vmatpush.xpose.msra.mxu0 0.0
    %702 = vmatpush.xpose.msra.mxu0 0.0
    %703 = vmatpush.xpose.msra.mxu0 0.0
    %704 = vmatpush.xpose.msra.mxu0 0.0
    %705 = vmatpush.xpose.msra.mxu0 0.0
    %706 = vmatpush.xpose.msra.mxu0 %v690
    %707 = vmatpush.xpose.msra.mxu0 %v688
    %708 = vmatmul.f32.gmra.mxu0 %v684
    %v709 = vpop.f32.mrf.mxu0
    %v710 = vadd.f32 0.0, %v709
    %711 = vmatmul.f32.gmra.mxu0 %v686
    %v712 = vpop.f32.mrf.mxu0
    %v713 = vadd.f32 0.0, %v712
    %714 = vdwg.mxu0
    %v715 = vsel %vm166, %v671, -inf
    %716 = vmax.xlane.f32.xlu0 %v715
    %v717 = vpop.xlane.xlu0 %716
    %v718 = vsel %vm166, %v674, -inf
    %719 = vmax.xlane.f32.xlu0 %v718
    %v720 = vpop.xlane.xlu0 %719
    %v721 = vsel %vm166, %v710, -inf
    %722 = vmax.xlane.f32.xlu0 %v721
    %v723 = vpop.xlane.xlu0 %722
    %v724 = vsel %vm166, %v713, -inf
    %725 = vmax.xlane.f32.xlu0 %v724
    %v726 = vpop.xlane.xlu0 %725
    %v727 = vsub.f32 %v671, %v717
    %v728 = vsub.f32 %v674, %v720
    %v729 = vsub.f32 %v710, %v723
    %v730 = vsub.f32 %v713, %v726
    %v731 = vmul.f32 %v727, 1.442695
    %v732 = vpow.pop %v731
    %v733 = vmul.f32 %v728, 1.442695
    %v734 = vpow.pop %v733
    %v735 = vmul.f32 %v729, 1.442695
    %v736 = vpow.pop %v735
    %v737 = vmul.f32 %v730, 1.442695
    %v738 = vpow.pop %v737
    %v739 = vsel %vm166, %v732, 0.0
    %740 = vadd.xlane.f32.xlu0 %v739
    %v741 = vpop.xlane.xlu0 %740
    %v742 = vsel %vm166, %v734, 0.0
    %743 = vadd.xlane.f32.xlu0 %v742
    %v744 = vpop.xlane.xlu0 %743
    %v745 = vsel %vm166, %v736, 0.0
    %746 = vadd.xlane.f32.xlu0 %v745
    %v747 = vpop.xlane.xlu0 %746
    %v748 = vsel %vm166, %v738, 0.0
    %749 = vadd.xlane.f32.xlu0 %v748
    %v750 = vpop.xlane.xlu0 %749
    %v751 = vrcp.pop %v741
    %v752 = vmul.f32 %v741, %v751
    %v753 = vsub.f32 1.0, %v752
    %v754 = vmul.f32 %v751, %v753
    %v755 = vadd.f32 %v751, %v754
    %vm756 = vweird.f32 %v741
    %vm757 = vweird.f32 %v751
    %vm758 = vmor %vm756, %vm757
    %v759 = vsel %vm758, %v751, %v755
    %v760 = vand.u32 2147483647, %v741
    %vm761 = vcmp.eq.f32.partialorder %v760, 8.507059e+37
    %v762 = vand.u32 %v741, 2147483648
    %v763 = vor.u32 1.1754944e-38, %v762
    %v764 = vsel %vm761, %v763, %v759
    %v765 = vrcp.pop %v744
    %v766 = vmul.f32 %v744, %v765
    %v767 = vsub.f32 1.0, %v766
    %v768 = vmul.f32 %v765, %v767
    %v769 = vadd.f32 %v765, %v768
    %vm770 = vweird.f32 %v744
    %vm771 = vweird.f32 %v765
    %vm772 = vmor %vm770, %vm771
    %v773 = vsel %vm772, %v765, %v769
    %v774 = vand.u32 2147483647, %v744
    %vm775 = vcmp.eq.f32.partialorder %v774, 8.507059e+37
    %v776 = vand.u32 %v744, 2147483648
    %v777 = vor.u32 1.1754944e-38, %v776
    %v778 = vsel %vm775, %v777, %v773
    %v779 = vrcp.pop %v747
    %v780 = vmul.f32 %v747, %v779
    %v781 = vsub.f32 1.0, %v780
    %v782 = vmul.f32 %v779, %v781
    %v783 = vadd.f32 %v779, %v782
    %vm784 = vweird.f32 %v747
    %vm785 = vweird.f32 %v779
    %vm786 = vmor %vm784, %vm785
    %v787 = vsel %vm786, %v779, %v783
    %v788 = vand.u32 2147483647, %v747
    %vm789 = vcmp.eq.f32.partialorder %v788, 8.507059e+37
    %v790 = vand.u32 %v747, 2147483648
    %v791 = vor.u32 1.1754944e-38, %v790
    %v792 = vsel %vm789, %v791, %v787
    %v793 = vrcp.pop %v750
    %v794 = vmul.f32 %v750, %v793
    %v795 = vsub.f32 1.0, %v794
    %v796 = vmul.f32 %v793, %v795
    %v797 = vadd.f32 %v793, %v796
    %vm798 = vweird.f32 %v750
    %vm799 = vweird.f32 %v793
    %vm800 = vmor %vm798, %vm799
    %v801 = vsel %vm800, %v793, %v797
    %v802 = vand.u32 2147483647, %v750
    %vm803 = vcmp.eq.f32.partialorder %v802, 8.507059e+37
    %v804 = vand.u32 %v750, 2147483648
    %v805 = vor.u32 1.1754944e-38, %v804
    %v806 = vsel %vm803, %v805, %v801
    %v807 = vmul.f32 %v732, %v764
    %v808 = vmul.f32 %v734, %v778
    %v809 = vmul.f32 %v736, %v792
    %v810 = vmul.f32 %v738, %v806
    %811 = vrot.lane.b32.xlu0 %v149, 96
    %v812 = vpop.permute.xlu0 %811
    %813 = vrot.lane.b32.xlu0 %v152, 96
    %v814 = vpop.permute.xlu0 %813
    %v818 = vsel %vm166, %v807, 0
    %v821 = vsel %vm166, %v808, 0
    %823 = vmatpush.msra.mxu0 0.0
    %824 = vmatpush.msra.mxu0 0.0
    %825 = vmatpush.msra.mxu0 0.0
    %826 = vmatpush.msra.mxu0 0.0
    %827 = vmatpush.msra.mxu0 0.0
    %828 = vmatpush.msra.mxu0 0.0
    %829 = vmatpush.msra.mxu0 0.0
    %830 = vmatpush.msra.mxu0 0.0
    %831 = vmatpush.msra.mxu0 0.0
    %832 = vmatpush.msra.mxu0 0.0
    %833 = vmatpush.msra.mxu0 0.0
    %834 = vmatpush.msra.mxu0 0.0
    %835 = vmatpush.msra.mxu0 0.0
    %836 = vmatpush.msra.mxu0 0.0
    %837 = vmatpush.msra.mxu0 %v814
    %838 = vmatpush.msra.mxu0 %v812
    %839 = vmatmul.f32.gmra.mxu0 %v818
    %v840 = vpop.f32.mrf.mxu0
    %v841 = vadd.f32 0.0, %v840
    %842 = vmatmul.f32.gmra.mxu0 %v821
    %v843 = vpop.f32.mrf.mxu0
    %v844 = vadd.f32 0.0, %v843
    %845 = vdwg.mxu0
    %846 = vrot.lane.b32.xlu0 %v155, 96
    %v847 = vpop.permute.xlu0 %846
    %848 = vrot.lane.b32.xlu0 %v158, 96
    %v849 = vpop.permute.xlu0 %848
    %v853 = vsel %vm166, %v809, 0
    %v856 = vsel %vm166, %v810, 0
    %858 = vmatpush.msra.mxu0 0.0
    %859 = vmatpush.msra.mxu0 0.0
    %860 = vmatpush.msra.mxu0 0.0
    %861 = vmatpush.msra.mxu0 0.0
    %862 = vmatpush.msra.mxu0 0.0
    %863 = vmatpush.msra.mxu0 0.0
    %864 = vmatpush.msra.mxu0 0.0
    %865 = vmatpush.msra.mxu0 0.0
    %866 = vmatpush.msra.mxu0 0.0
    %867 = vmatpush.msra.mxu0 0.0
    %868 = vmatpush.msra.mxu0 0.0
    %869 = vmatpush.msra.mxu0 0.0
    %870 = vmatpush.msra.mxu0 0.0
    %871 = vmatpush.msra.mxu0 0.0
    %872 = vmatpush.msra.mxu0 %v849
    %873 = vmatpush.msra.mxu0 %v847
    %874 = vmatmul.f32.gmra.mxu0 %v853
    %v875 = vpop.f32.mrf.mxu0
    %v876 = vadd.f32 0.0, %v875
    %877 = vmatmul.f32.gmra.mxu0 %v856
    %v878 = vpop.f32.mrf.mxu0
    %v879 = vadd.f32 0.0, %v878
    %880 = vdwg.mxu0
    %881 = vrot.lane.b32.xlu0 %v120, 80
    %v882 = vpop.permute.xlu0 %881
    %883 = vrot.lane.b32.xlu0 %v123, 80
    %v884 = vpop.permute.xlu0 %883
    %885 = vrot.lane.b32.xlu0 %v120, 16
    %v886 = vpop.permute.xlu0 %885
    %887 = vrot.lane.b32.xlu0 %v123, 16
    %v888 = vpop.permute.xlu0 %887
    %v889 = vsel %vm166, %v882, 0
    %v891 = vsel %vm166, %v884, 0
    %v893 = vsel %vm166, %v886, 0
    %v895 = vsel %vm166, %v888, 0
    %897 = vmatpush.xpose.msra.mxu0 0.0
    %898 = vmatpush.xpose.msra.mxu0 0.0
    %899 = vmatpush.xpose.msra.mxu0 0.0
    %900 = vmatpush.xpose.msra.mxu0 0.0
    %901 = vmatpush.xpose.msra.mxu0 0.0
    %902 = vmatpush.xpose.msra.mxu0 0.0
    %903 = vmatpush.xpose.msra.mxu0 0.0
    %904 = vmatpush.xpose.msra.mxu0 0.0
    %905 = vmatpush.xpose.msra.mxu0 0.0
    %906 = vmatpush.xpose.msra.mxu0 0.0
    %907 = vmatpush.xpose.msra.mxu0 0.0
    %908 = vmatpush.xpose.msra.mxu0 0.0
    %909 = vmatpush.xpose.msra.mxu0 0.0
    %910 = vmatpush.xpose.msra.mxu0 0.0
    %911 = vmatpush.xpose.msra.mxu0 %v895
    %912 = vmatpush.xpose.msra.mxu0 %v893
    %913 = vmatmul.f32.gmra.mxu0 %v889
    %v914 = vpop.f32.mrf.mxu0
    %v915 = vadd.f32 0.0, %v914
    %916 = vmatmul.f32.gmra.mxu0 %v891
    %v917 = vpop.f32.mrf.mxu0
    %v918 = vadd.f32 0.0, %v917
    %919 = vdwg.mxu0
    %920 = vrot.lane.b32.xlu0 %v126, 80
    %v921 = vpop.permute.xlu0 %920
    %922 = vrot.lane.b32.xlu0 %v129, 80
    %v923 = vpop.permute.xlu0 %922
    %924 = vrot.lane.b32.xlu0 %v126, 16
    %v925 = vpop.permute.xlu0 %924
    %926 = vrot.lane.b32.xlu0 %v129, 16
    %v927 = vpop.permute.xlu0 %926
    %v928 = vsel %vm166, %v921, 0
    %v930 = vsel %vm166, %v923, 0
    %v932 = vsel %vm166, %v925, 0
    %v934 = vsel %vm166, %v927, 0
    %936 = vmatpush.xpose.msra.mxu0 0.0
    %937 = vmatpush.xpose.msra.mxu0 0.0
    %938 = vmatpush.xpose.msra.mxu0 0.0
    %939 = vmatpush.xpose.msra.mxu0 0.0
    %940 = vmatpush.xpose.msra.mxu0 0.0
    %941 = vmatpush.xpose.msra.mxu0 0.0
    %942 = vmatpush.xpose.msra.mxu0 0.0
    %943 = vmatpush.xpose.msra.mxu0 0.0
    %944 = vmatpush.xpose.msra.mxu0 0.0
    %945 = vmatpush.xpose.msra.mxu0 0.0
    %946 = vmatpush.xpose.msra.mxu0 0.0
    %947 = vmatpush.xpose.msra.mxu0 0.0
    %948 = vmatpush.xpose.msra.mxu0 0.0
    %949 = vmatpush.xpose.msra.mxu0 0.0
    %950 = vmatpush.xpose.msra.mxu0 %v934
    %951 = vmatpush.xpose.msra.mxu0 %v932
    %952 = vmatmul.f32.gmra.mxu0 %v928
    %v953 = vpop.f32.mrf.mxu0
    %v954 = vadd.f32 0.0, %v953
    %955 = vmatmul.f32.gmra.mxu0 %v930
    %v956 = vpop.f32.mrf.mxu0
    %v957 = vadd.f32 0.0, %v956
    %958 = vdwg.mxu0
    %v959 = vsel %vm166, %v915, -inf
    %960 = vmax.xlane.f32.xlu0 %v959
    %v961 = vpop.xlane.xlu0 %960
    %v962 = vsel %vm166, %v918, -inf
    %963 = vmax.xlane.f32.xlu0 %v962
    %v964 = vpop.xlane.xlu0 %963
    %v965 = vsel %vm166, %v954, -inf
    %966 = vmax.xlane.f32.xlu0 %v965
    %v967 = vpop.xlane.xlu0 %966
    %v968 = vsel %vm166, %v957, -inf
    %969 = vmax.xlane.f32.xlu0 %v968
    %v970 = vpop.xlane.xlu0 %969
    %v971 = vsub.f32 %v915, %v961
    %v972 = vsub.f32 %v918, %v964
    %v973 = vsub.f32 %v954, %v967
    %v974 = vsub.f32 %v957, %v970
    %v975 = vmul.f32 %v971, 1.442695
    %v976 = vpow.pop %v975
    %v977 = vmul.f32 %v972, 1.442695
    %v978 = vpow.pop %v977
    %v979 = vmul.f32 %v973, 1.442695
    %v980 = vpow.pop %v979
    %v981 = vmul.f32 %v974, 1.442695
    %v982 = vpow.pop %v981
    %v983 = vsel %vm166, %v976, 0.0
    %984 = vadd.xlane.f32.xlu0 %v983
    %v985 = vpop.xlane.xlu0 %984
    %v986 = vsel %vm166, %v978, 0.0
    %987 = vadd.xlane.f32.xlu0 %v986
    %v988 = vpop.xlane.xlu0 %987
    %v989 = vsel %vm166, %v980, 0.0
    %990 = vadd.xlane.f32.xlu0 %v989
    %v991 = vpop.xlane.xlu0 %990
    %v992 = vsel %vm166, %v982, 0.0
    %993 = vadd.xlane.f32.xlu0 %v992
    %v994 = vpop.xlane.xlu0 %993
    %v995 = vrcp.pop %v985
    %v996 = vmul.f32 %v985, %v995
    %v997 = vsub.f32 1.0, %v996
    %v998 = vmul.f32 %v995, %v997
    %v999 = vadd.f32 %v995, %v998
    %vm1000 = vweird.f32 %v985
    %vm1001 = vweird.f32 %v995
    %vm1002 = vmor %vm1000, %vm1001
    %v1003 = vsel %vm1002, %v995, %v999
    %v1004 = vand.u32 2147483647, %v985
    %vm1005 = vcmp.eq.f32.partialorder %v1004, 8.507059e+37
    %v1006 = vand.u32 %v985, 2147483648
    %v1007 = vor.u32 1.1754944e-38, %v1006
    %v1008 = vsel %vm1005, %v1007, %v1003
    %v1009 = vrcp.pop %v988
    %v1010 = vmul.f32 %v988, %v1009
    %v1011 = vsub.f32 1.0, %v1010
    %v1012 = vmul.f32 %v1009, %v1011
    %v1013 = vadd.f32 %v1009, %v1012
    %vm1014 = vweird.f32 %v988
    %vm1015 = vweird.f32 %v1009
    %vm1016 = vmor %vm1014, %vm1015
    %v1017 = vsel %vm1016, %v1009, %v1013
    %v1018 = vand.u32 2147483647, %v988
    %vm1019 = vcmp.eq.f32.partialorder %v1018, 8.507059e+37
    %v1020 = vand.u32 %v988, 2147483648
    %v1021 = vor.u32 1.1754944e-38, %v1020
    %v1022 = vsel %vm1019, %v1021, %v1017
    %v1023 = vrcp.pop %v991
    %v1024 = vmul.f32 %v991, %v1023
    %v1025 = vsub.f32 1.0, %v1024
    %v1026 = vmul.f32 %v1023, %v1025
    %v1027 = vadd.f32 %v1023, %v1026
    %vm1028 = vweird.f32 %v991
    %vm1029 = vweird.f32 %v1023
    %vm1030 = vmor %vm1028, %vm1029
    %v1031 = vsel %vm1030, %v1023, %v1027
    %v1032 = vand.u32 2147483647, %v991
    %vm1033 = vcmp.eq.f32.partialorder %v1032, 8.507059e+37
    %v1034 = vand.u32 %v991, 2147483648
    %v1035 = vor.u32 1.1754944e-38, %v1034
    %v1036 = vsel %vm1033, %v1035, %v1031
    %v1037 = vrcp.pop %v994
    %v1038 = vmul.f32 %v994, %v1037
    %v1039 = vsub.f32 1.0, %v1038
    %v1040 = vmul.f32 %v1037, %v1039
    %v1041 = vadd.f32 %v1037, %v1040
    %vm1042 = vweird.f32 %v994
    %vm1043 = vweird.f32 %v1037
    %vm1044 = vmor %vm1042, %vm1043
    %v1045 = vsel %vm1044, %v1037, %v1041
    %v1046 = vand.u32 2147483647, %v994
    %vm1047 = vcmp.eq.f32.partialorder %v1046, 8.507059e+37
    %v1048 = vand.u32 %v994, 2147483648
    %v1049 = vor.u32 1.1754944e-38, %v1048
    %v1050 = vsel %vm1047, %v1049, %v1045
    %v1051 = vmul.f32 %v976, %v1008
    %v1052 = vmul.f32 %v978, %v1022
    %v1053 = vmul.f32 %v980, %v1036
    %v1054 = vmul.f32 %v982, %v1050
    %1055 = vrot.lane.b32.xlu0 %v149, 80
    %v1056 = vpop.permute.xlu0 %1055
    %1057 = vrot.lane.b32.xlu0 %v152, 80
    %v1058 = vpop.permute.xlu0 %1057
    %v1062 = vsel %vm166, %v1051, 0
    %v1065 = vsel %vm166, %v1052, 0
    %1067 = vmatpush.msra.mxu0 0.0
    %1068 = vmatpush.msra.mxu0 0.0
    %1069 = vmatpush.msra.mxu0 0.0
    %1070 = vmatpush.msra.mxu0 0.0
    %1071 = vmatpush.msra.mxu0 0.0
    %1072 = vmatpush.msra.mxu0 0.0
    %1073 = vmatpush.msra.mxu0 0.0
    %1074 = vmatpush.msra.mxu0 0.0
    %1075 = vmatpush.msra.mxu0 0.0
    %1076 = vmatpush.msra.mxu0 0.0
    %1077 = vmatpush.msra.mxu0 0.0
    %1078 = vmatpush.msra.mxu0 0.0
    %1079 = vmatpush.msra.mxu0 0.0
    %1080 = vmatpush.msra.mxu0 0.0
    %1081 = vmatpush.msra.mxu0 %v1058
    %1082 = vmatpush.msra.mxu0 %v1056
    %1083 = vmatmul.f32.gmra.mxu0 %v1062
    %v1084 = vpop.f32.mrf.mxu0
    %v1085 = vadd.f32 0.0, %v1084
    %1086 = vmatmul.f32.gmra.mxu0 %v1065
    %v1087 = vpop.f32.mrf.mxu0
    %v1088 = vadd.f32 0.0, %v1087
    %1089 = vdwg.mxu0
    %1090 = vrot.lane.b32.xlu0 %v155, 80
    %v1091 = vpop.permute.xlu0 %1090
    %1092 = vrot.lane.b32.xlu0 %v158, 80
    %v1093 = vpop.permute.xlu0 %1092
    %v1097 = vsel %vm166, %v1053, 0
    %v1100 = vsel %vm166, %v1054, 0
    %1102 = vmatpush.msra.mxu0 0.0
    %1103 = vmatpush.msra.mxu0 0.0
    %1104 = vmatpush.msra.mxu0 0.0
    %1105 = vmatpush.msra.mxu0 0.0
    %1106 = vmatpush.msra.mxu0 0.0
    %1107 = vmatpush.msra.mxu0 0.0
    %1108 = vmatpush.msra.mxu0 0.0
    %1109 = vmatpush.msra.mxu0 0.0
    %1110 = vmatpush.msra.mxu0 0.0
    %1111 = vmatpush.msra.mxu0 0.0
    %1112 = vmatpush.msra.mxu0 0.0
    %1113 = vmatpush.msra.mxu0 0.0
    %1114 = vmatpush.msra.mxu0 0.0
    %1115 = vmatpush.msra.mxu0 0.0
    %1116 = vmatpush.msra.mxu0 %v1093
    %1117 = vmatpush.msra.mxu0 %v1091
    %1118 = vmatmul.f32.gmra.mxu0 %v1097
    %v1119 = vpop.f32.mrf.mxu0
    %v1120 = vadd.f32 0.0, %v1119
    %1121 = vmatmul.f32.gmra.mxu0 %v1100
    %v1122 = vpop.f32.mrf.mxu0
    %v1123 = vadd.f32 0.0, %v1122
    %1124 = vdwg.mxu0
    %1129 = vrot.lane.b32.xlu0 %v595, 16
    %v1130 = vpop.permute.xlu0 %1129
    %1131 = vrot.lane.b32.xlu0 %v598, 16
    %v1132 = vpop.permute.xlu0 %1131
    %1133 = vrot.lane.b32.xlu0 %v632, 16
    %v1134 = vpop.permute.xlu0 %1133
    %1135 = vrot.lane.b32.xlu0 %v635, 16
    %v1136 = vpop.permute.xlu0 %1135
    %1145 = vrot.lane.b32.xlu0 %v841, 32
    %v1146 = vpop.permute.xlu0 %1145
    %1147 = vrot.lane.b32.xlu0 %v844, 32
    %v1148 = vpop.permute.xlu0 %1147
    %1149 = vrot.lane.b32.xlu0 %v876, 32
    %v1150 = vpop.permute.xlu0 %1149
    %1151 = vrot.lane.b32.xlu0 %v879, 32
    %v1152 = vpop.permute.xlu0 %1151
    %1161 = vrot.lane.b32.xlu0 %v1085, 48
    %v1162 = vpop.permute.xlu0 %1161
    %1163 = vrot.lane.b32.xlu0 %v1088, 48
    %v1164 = vpop.permute.xlu0 %1163
    %1165 = vrot.lane.b32.xlu0 %v1120, 48
    %v1166 = vpop.permute.xlu0 %1165
    %1167 = vrot.lane.b32.xlu0 %v1123, 48
    %v1168 = vpop.permute.xlu0 %1167
    %v1173 = vsel %vm166, %v355, %v1130
    %v1174 = vsel %vm166, %v358, %v1132
    %v1175 = vsel %vm166, %v384, %v1134
    %v1176 = vsel %vm166, %v387, %v1136
    %vm1177 = vcmask 261120
    %v1178 = vsel %vm1177, %v1173, %v1146
    %v1179 = vsel %vm1177, %v1174, %v1148
    %v1180 = vsel %vm1177, %v1175, %v1150
    %v1181 = vsel %vm1177, %v1176, %v1152
    %vm1182 = vcmask 392192
    %v1183 = vsel %vm1182, %v1178, %v1162
    %v1184 = vsel %vm1182, %v1179, %v1164
    %v1185 = vsel %vm1182, %v1180, %v1166
    %v1186 = vsel %vm1182, %v1181, %v1168
    %v1187 = vld [vmem:[%s2] sm:$0xff]
    %v1188 = vld [vmem:[%s2 + $0x8] sm:$0xff]
    %v1189 = vld [vmem:[%s2 + $0x10] sm:$0xff]
    %v1190 = vld [vmem:[%s2 + $0x18] sm:$0xff]
    %v1191 = vld [vmem:[%s2 + $0x20] sm:$0xff]
    %v1192 = vld [vmem:[%s2 + $0x28] sm:$0xff]
    %v1193 = vld [vmem:[%s2 + $0x30] sm:$0xff]
    %v1194 = vld [vmem:[%s2 + $0x38] sm:$0xff]
    %v1195 = vld [vmem:[#allocation7] sm:$0xff]
    %v1197 = vsel %vm89, %v1183, 0
    %v1200 = vsel %vm89, %v1184, 0
    %v1203 = vsel %vm89, %v1185, 0
    %v1206 = vsel %vm89, %v1186, 0
    %1208 = vmatpush.msra.mxu0 0.0
    %1209 = vmatpush.msra.mxu0 0.0
    %1210 = vmatpush.msra.mxu0 0.0
    %1211 = vmatpush.msra.mxu0 0.0
    %1212 = vmatpush.msra.mxu0 0.0
    %1213 = vmatpush.msra.mxu0 0.0
    %1214 = vmatpush.msra.mxu0 0.0
    %1215 = vmatpush.msra.mxu0 0.0
    %1216 = vmatpush.msra.mxu0 %v1194
    %1217 = vmatpush.msra.mxu0 %v1193
    %1218 = vmatpush.msra.mxu0 %v1192
    %1219 = vmatpush.msra.mxu0 %v1191
    %1220 = vmatpush.msra.mxu0 %v1190
    %1221 = vmatpush.msra.mxu0 %v1189
    %1222 = vmatpush.msra.mxu0 %v1188
    %1223 = vmatpush.msra.mxu0 %v1187
    %1224 = vmatmul.f32.gmra.mxu0 %v1197
    %v1225 = vpop.f32.mrf.mxu0
    %v1226 = vadd.f32 %v69, %v1225
    %1227 = vmatmul.f32.gmra.mxu0 %v1200
    %v1228 = vpop.f32.mrf.mxu0
    %v1229 = vadd.f32 %v70, %v1228
    %1230 = vmatmul.f32.gmra.mxu0 %v1203
    %v1231 = vpop.f32.mrf.mxu0
    %v1232 = vadd.f32 %v71, %v1231
    %1233 = vmatmul.f32.gmra.mxu0 %v1206
    %v1234 = vpop.f32.mrf.mxu0
    %v1235 = vadd.f32 %v72, %v1234
    %1236 = vdwg.mxu0
    %v1237 = vsel %vm89, %v1226, 0.0
    %1238 = vadd.xlane.f32.xlu0 %v1237
    %v1239 = vpop.xlane.xlu0 %1238
    %v1240 = vsel %vm89, %v1229, 0.0
    %1241 = vadd.xlane.f32.xlu0 %v1240
    %v1242 = vpop.xlane.xlu0 %1241
    %v1243 = vsel %vm89, %v1232, 0.0
    %1244 = vadd.xlane.f32.xlu0 %v1243
    %v1245 = vpop.xlane.xlu0 %1244
    %v1246 = vsel %vm89, %v1235, 0.0
    %1247 = vadd.xlane.f32.xlu0 %v1246
    %v1248 = vpop.xlane.xlu0 %1247
    %v1249 = vrcp.pop 64.0
    %v1250 = vmul.f32 64.0, %v1249
    %v1251 = vsub.f32 1.0, %v1250
    %v1252 = vmul.f32 %v1249, %v1251
    %v1253 = vadd.f32 %v1249, %v1252
    %vm1254 = vweird.f32 %v1249
    %v1255 = vsel %vm1254, %v1249, %v1253
    %v1256 = vmul.f32 %v1239, %v1255
    %v1257 = vmul.f32 %v1242, %v1255
    %v1258 = vmul.f32 %v1245, %v1255
    %v1259 = vmul.f32 %v1248, %v1255
    %v1260 = vsub.f32 %v1226, %v1256
    %v1261 = vsub.f32 %v1229, %v1257
    %v1262 = vsub.f32 %v1232, %v1258
    %v1263 = vsub.f32 %v1235, %v1259
    %v1264 = vmul.f32 %v1260, %v1260
    %v1265 = vmul.f32 %v1261, %v1261
    %v1266 = vmul.f32 %v1262, %v1262
    %v1267 = vmul.f32 %v1263, %v1263
    %v1268 = vsel %vm89, %v1264, 0.0
    %1269 = vadd.xlane.f32.xlu0 %v1268
    %v1270 = vpop.xlane.xlu0 %1269
    %v1271 = vsel %vm89, %v1265, 0.0
    %1272 = vadd.xlane.f32.xlu0 %v1271
    %v1273 = vpop.xlane.xlu0 %1272
    %v1274 = vsel %vm89, %v1266, 0.0
    %1275 = vadd.xlane.f32.xlu0 %v1274
    %v1276 = vpop.xlane.xlu0 %1275
    %v1277 = vsel %vm89, %v1267, 0.0
    %1278 = vadd.xlane.f32.xlu0 %v1277
    %v1279 = vpop.xlane.xlu0 %1278
    %v1280 = vmul.f32 %v1270, %v1255
    %v1281 = vmul.f32 %v1273, %v1255
    %v1282 = vmul.f32 %v1276, %v1255
    %v1283 = vmul.f32 %v1279, %v1255
    %v1284 = vadd.f32 %v1280, 1e-05
    %v1285 = vadd.f32 %v1281, 1e-05
    %v1286 = vadd.f32 %v1282, 1e-05
    %v1287 = vadd.f32 %v1283, 1e-05
    %v1288 = vrsqrt.pop %v1284
    %v1289 = vmul.f32 %v1288, %v1284
    %v1290 = vmul.f32 %v1289, %v1288
    %v1291 = vmul.f32 0.5, %v1290
    %v1292 = vsub.f32 1.5, %v1291
    %v1293 = vmul.f32 %v1288, %v1292
    %vm1294 = vweird.f32 %v1284
    %vm1295 = vweird.f32 %v1288
    %vm1296 = vmor %vm1294, %vm1295
    %v1297 = vsel %vm1296, %v1288, %v1293
    %v1298 = vrsqrt.pop %v1285
    %v1299 = vmul.f32 %v1298, %v1285
    %v1300 = vmul.f32 %v1299, %v1298
    %v1301 = vmul.f32 0.5, %v1300
    %v1302 = vsub.f32 1.5, %v1301
    %v1303 = vmul.f32 %v1298, %v1302
    %vm1304 = vweird.f32 %v1285
    %vm1305 = vweird.f32 %v1298
    %vm1306 = vmor %vm1304, %vm1305
    %v1307 = vsel %vm1306, %v1298, %v1303
    %v1308 = vrsqrt.pop %v1286
    %v1309 = vmul.f32 %v1308, %v1286
    %v1310 = vmul.f32 %v1309, %v1308
    %v1311 = vmul.f32 0.5, %v1310
    %v1312 = vsub.f32 1.5, %v1311
    %v1313 = vmul.f32 %v1308, %v1312
    %vm1314 = vweird.f32 %v1286
    %vm1315 = vweird.f32 %v1308
    %vm1316 = vmor %vm1314, %vm1315
    %v1317 = vsel %vm1316, %v1308, %v1313
    %v1318 = vrsqrt.pop %v1287
    %v1319 = vmul.f32 %v1318, %v1287
    %v1320 = vmul.f32 %v1319, %v1318
    %v1321 = vmul.f32 0.5, %v1320
    %v1322 = vsub.f32 1.5, %v1321
    %v1323 = vmul.f32 %v1318, %v1322
    %vm1324 = vweird.f32 %v1287
    %vm1325 = vweird.f32 %v1318
    %vm1326 = vmor %vm1324, %vm1325
    %v1327 = vsel %vm1326, %v1318, %v1323
    %v1328 = vmul.f32 %v1260, %v1297
    %v1329 = vmul.f32 %v1261, %v1307
    %v1330 = vmul.f32 %v1262, %v1317
    %v1331 = vmul.f32 %v1263, %v1327
    %v1332 = vperm.slane %v1195, 0
    %v1333 = vmul.f32 %v1328, %v1332
    %v1334 = vmul.f32 %v1329, %v1332
    %v1335 = vmul.f32 %v1330, %v1332
    %v1336 = vmul.f32 %v1331, %v1332
    %v1337 = vperm.slane %v1195, 1
    %v1338 = vadd.f32 %v1333, %v1337
    %v1339 = vadd.f32 %v1334, %v1337
    %v1340 = vadd.f32 %v1335, %v1337
    %v1341 = vadd.f32 %v1336, %v1337
    %v1342 = vld [vmem:[#allocation5] sm:$0xff]
    %v1343 = vld [vmem:[#allocation5 + $0x8] sm:$0xff]
    %v1344 = vld [vmem:[#allocation5 + $0x10] sm:$0xff]
    %v1345 = vld [vmem:[#allocation5 + $0x18] sm:$0xff]
    %v1346 = vld [vmem:[#allocation5 + $0x20] sm:$0xff]
    %v1347 = vld [vmem:[#allocation5 + $0x28] sm:$0xff]
    %v1348 = vld [vmem:[#allocation5 + $0x30] sm:$0xff]
    %v1349 = vld [vmem:[#allocation5 + $0x38] sm:$0xff]
    %v1350 = vperm.slane %v1195, 2
    %v1352 = vsel %vm89, %v1338, 0
    %v1355 = vsel %vm89, %v1339, 0
    %v1358 = vsel %vm89, %v1340, 0
    %v1361 = vsel %vm89, %v1341, 0
    %1363 = vmatpush.msra.mxu0 0.0
    %1364 = vmatpush.msra.mxu0 0.0
    %1365 = vmatpush.msra.mxu0 0.0
    %1366 = vmatpush.msra.mxu0 0.0
    %1367 = vmatpush.msra.mxu0 0.0
    %1368 = vmatpush.msra.mxu0 0.0
    %1369 = vmatpush.msra.mxu0 0.0
    %1370 = vmatpush.msra.mxu0 0.0
    %1371 = vmatpush.msra.mxu0 %v1349
    %1372 = vmatpush.msra.mxu0 %v1348
    %1373 = vmatpush.msra.mxu0 %v1347
    %1374 = vmatpush.msra.mxu0 %v1346
    %1375 = vmatpush.msra.mxu0 %v1345
    %1376 = vmatpush.msra.mxu0 %v1344
    %1377 = vmatpush.msra.mxu0 %v1343
    %1378 = vmatpush.msra.mxu0 %v1342
    %1379 = vmatmul.f32.gmra.mxu0 %v1352
    %v1380 = vpop.f32.mrf.mxu0
    %v1381 = vadd.f32 %v1350, %v1380
    %1382 = vmatmul.f32.gmra.mxu0 %v1355
    %v1383 = vpop.f32.mrf.mxu0
    %v1384 = vadd.f32 %v1350, %v1383
    %1385 = vmatmul.f32.gmra.mxu0 %v1358
    %v1386 = vpop.f32.mrf.mxu0
    %v1387 = vadd.f32 %v1350, %v1386
    %1388 = vmatmul.f32.gmra.mxu0 %v1361
    %v1389 = vpop.f32.mrf.mxu0
    %v1390 = vadd.f32 %v1350, %v1389
    %1391 = vdwg.mxu0
    %v1392 = vmax.f32 %v1381, 0.0
    %v1393 = vmax.f32 %v1384, 0.0
    %v1394 = vmax.f32 %v1387, 0.0
    %v1395 = vmax.f32 %v1390, 0.0
    %v1396 = vld [vmem:[%s4] sm:$0xff]
    %v1397 = vld [vmem:[%s4 + $0x8] sm:$0xff]
    %v1398 = vld [vmem:[%s4 + $0x10] sm:$0xff]
    %v1399 = vld [vmem:[%s4 + $0x18] sm:$0xff]
    %v1400 = vld [vmem:[%s4 + $0x20] sm:$0xff]
    %v1401 = vld [vmem:[%s4 + $0x28] sm:$0xff]
    %v1402 = vld [vmem:[%s4 + $0x30] sm:$0xff]
    %v1403 = vld [vmem:[%s4 + $0x38] sm:$0xff]
    %v1404 = vld [vmem:[%s4 + $0x40] sm:$0xff]
    %v1405 = vld [vmem:[%s4 + $0x48] sm:$0xff]
    %v1406 = vld [vmem:[%s4 + $0x50] sm:$0xff]
    %v1407 = vld [vmem:[%s4 + $0x58] sm:$0xff]
    %v1408 = vld [vmem:[%s4 + $0x60] sm:$0xff]
    %v1409 = vld [vmem:[%s4 + $0x68] sm:$0xff]
    %v1410 = vld [vmem:[%s4 + $0x70] sm:$0xff]
    %v1411 = vld [vmem:[%s4 + $0x78] sm:$0xff]
    %v1412 = vperm.slane %v1195, 3
    %1413 = vmatpush.msra.mxu0 %v1411
    %1414 = vmatpush.msra.mxu0 %v1410
    %1415 = vmatpush.msra.mxu0 %v1409
    %1416 = vmatpush.msra.mxu0 %v1408
    %1417 = vmatpush.msra.mxu0 %v1407
    %1418 = vmatpush.msra.mxu0 %v1406
    %1419 = vmatpush.msra.mxu0 %v1405
    %1420 = vmatpush.msra.mxu0 %v1404
    %1421 = vmatpush.msra.mxu0 %v1403
    %1422 = vmatpush.msra.mxu0 %v1402
    %1423 = vmatpush.msra.mxu0 %v1401
    %1424 = vmatpush.msra.mxu0 %v1400
    %1425 = vmatpush.msra.mxu0 %v1399
    %1426 = vmatpush.msra.mxu0 %v1398
    %1427 = vmatpush.msra.mxu0 %v1397
    %1428 = vmatpush.msra.mxu0 %v1396
    %1429 = vmatmul.f32.gmra.mxu0 %v1392
    %v1430 = vpop.f32.mrf.mxu0
    %v1431 = vadd.f32 %v1412, %v1430
    %1432 = vmatmul.f32.gmra.mxu0 %v1393
    %v1433 = vpop.f32.mrf.mxu0
    %v1434 = vadd.f32 %v1412, %v1433
    %1435 = vmatmul.f32.gmra.mxu0 %v1394
    %v1436 = vpop.f32.mrf.mxu0
    %v1437 = vadd.f32 %v1412, %v1436
    %1438 = vmatmul.f32.gmra.mxu0 %v1395
    %v1439 = vpop.f32.mrf.mxu0
    %v1440 = vadd.f32 %v1412, %v1439
    %1441 = vdwg.mxu0
    %v1442 = vadd.f32 %v1431, %v1338
    %v1443 = vadd.f32 %v1434, %v1339
    %v1444 = vadd.f32 %v1437, %v1340
    %v1445 = vadd.f32 %v1440, %v1341
    %v1446 = vsel %vm89, %v1442, 0.0
    %1447 = vadd.xlane.f32.xlu0 %v1446
    %v1448 = vpop.xlane.xlu0 %1447
    %v1449 = vsel %vm89, %v1443, 0.0
    %1450 = vadd.xlane.f32.xlu0 %v1449
    %v1451 = vpop.xlane.xlu0 %1450
    %v1452 = vsel %vm89, %v1444, 0.0
    %1453 = vadd.xlane.f32.xlu0 %v1452
    %v1454 = vpop.xlane.xlu0 %1453
    %v1455 = vsel %vm89, %v1445, 0.0
    %1456 = vadd.xlane.f32.xlu0 %v1455
    %v1457 = vpop.xlane.xlu0 %1456
    %v1458 = vmul.f32 %v1448, %v1255
    %v1459 = vmul.f32 %v1451, %v1255
    %v1460 = vmul.f32 %v1454, %v1255
    %v1461 = vmul.f32 %v1457, %v1255
    %v1462 = vsub.f32 %v1442, %v1458
    %v1463 = vsub.f32 %v1443, %v1459
    %v1464 = vsub.f32 %v1444, %v1460
    %v1465 = vsub.f32 %v1445, %v1461
    %v1466 = vmul.f32 %v1462, %v1462
    %v1467 = vmul.f32 %v1463, %v1463
    %v1468 = vmul.f32 %v1464, %v1464
    %v1469 = vmul.f32 %v1465, %v1465
    %v1470 = vsel %vm89, %v1466, 0.0
    %1471 = vadd.xlane.f32.xlu0 %v1470
    %v1472 = vpop.xlane.xlu0 %1471
    %v1473 = vsel %vm89, %v1467, 0.0
    %1474 = vadd.xlane.f32.xlu0 %v1473
    %v1475 = vpop.xlane.xlu0 %1474
    %v1476 = vsel %vm89, %v1468, 0.0
    %1477 = vadd.xlane.f32.xlu0 %v1476
    %v1478 = vpop.xlane.xlu0 %1477
    %v1479 = vsel %vm89, %v1469, 0.0
    %1480 = vadd.xlane.f32.xlu0 %v1479
    %v1481 = vpop.xlane.xlu0 %1480
    %v1482 = vmul.f32 %v1472, %v1255
    %v1483 = vmul.f32 %v1475, %v1255
    %v1484 = vmul.f32 %v1478, %v1255
    %v1485 = vmul.f32 %v1481, %v1255
    %v1486 = vadd.f32 %v1482, 1e-05
    %v1487 = vadd.f32 %v1483, 1e-05
    %v1488 = vadd.f32 %v1484, 1e-05
    %v1489 = vadd.f32 %v1485, 1e-05
    %v1490 = vrsqrt.pop %v1486
    %v1491 = vmul.f32 %v1490, %v1486
    %v1492 = vmul.f32 %v1491, %v1490
    %v1493 = vmul.f32 0.5, %v1492
    %v1494 = vsub.f32 1.5, %v1493
    %v1495 = vmul.f32 %v1490, %v1494
    %vm1496 = vweird.f32 %v1486
    %vm1497 = vweird.f32 %v1490
    %vm1498 = vmor %vm1496, %vm1497
    %v1499 = vsel %vm1498, %v1490, %v1495
    %v1500 = vrsqrt.pop %v1487
    %v1501 = vmul.f32 %v1500, %v1487
    %v1502 = vmul.f32 %v1501, %v1500
    %v1503 = vmul.f32 0.5, %v1502
    %v1504 = vsub.f32 1.5, %v1503
    %v1505 = vmul.f32 %v1500, %v1504
    %vm1506 = vweird.f32 %v1487
    %vm1507 = vweird.f32 %v1500
    %vm1508 = vmor %vm1506, %vm1507
    %v1509 = vsel %vm1508, %v1500, %v1505
    %v1510 = vrsqrt.pop %v1488
    %v1511 = vmul.f32 %v1510, %v1488
    %v1512 = vmul.f32 %v1511, %v1510
    %v1513 = vmul.f32 0.5, %v1512
    %v1514 = vsub.f32 1.5, %v1513
    %v1515 = vmul.f32 %v1510, %v1514
    %vm1516 = vweird.f32 %v1488
    %vm1517 = vweird.f32 %v1510
    %vm1518 = vmor %vm1516, %vm1517
    %v1519 = vsel %vm1518, %v1510, %v1515
    %v1520 = vrsqrt.pop %v1489
    %v1521 = vmul.f32 %v1520, %v1489
    %v1522 = vmul.f32 %v1521, %v1520
    %v1523 = vmul.f32 0.5, %v1522
    %v1524 = vsub.f32 1.5, %v1523
    %v1525 = vmul.f32 %v1520, %v1524
    %vm1526 = vweird.f32 %v1489
    %vm1527 = vweird.f32 %v1520
    %vm1528 = vmor %vm1526, %vm1527
    %v1529 = vsel %vm1528, %v1520, %v1525
    %v1530 = vmul.f32 %v1462, %v1499
    %v1531 = vmul.f32 %v1463, %v1509
    %v1532 = vmul.f32 %v1464, %v1519
    %v1533 = vmul.f32 %v1465, %v1529
    %v1534 = vperm.slane %v1195, 4
    %v1535 = vmul.f32 %v1530, %v1534
    %v1536 = vmul.f32 %v1531, %v1534
    %v1537 = vmul.f32 %v1532, %v1534
    %v1538 = vmul.f32 %v1533, %v1534
    %v1539 = vperm.slane %v1195, 5
    %v1540 = vadd.f32 %v1535, %v1539
    %v1541 = vadd.f32 %v1536, %v1539
    %v1542 = vadd.f32 %v1537, %v1539
    %v1543 = vadd.f32 %v1538, %v1539
    %1544 = vst.msk [vmem:[#allocation8] sm:$0xff] %vm89, %v1540
    %1545 = vst.msk [vmem:[#allocation8 + $0x8] sm:$0xff] %vm89, %v1541
    %1546 = vst.msk [vmem:[#allocation8 + $0x10] sm:$0xff] %vm89, %v1542
    %1547 = vst.msk [vmem:[#allocation8 + $0x18] sm:$0xff] %vm89, %v1543
    // Predicated region
    $region38: #{tpu_custom_call.1} parent=1 // pred_check
      _
    $region39: #{tpu_custom_call.1} parent=1 // pred_check_branch
      %1549 = sbr.rel (0) target = $region41
    $region40: #{tpu_custom_call.1} parent=1 // pred_region
      %1551 = vsyncadd [#allocation4], 0
      %s1552 = sshll.u32 [#allocation8], 4
      %s1553 = int_to_ptr.vmem [resolvable:$true] %s1552
      %s1554 = sshll.u32 %s6, 4
      %s1555 = int_to_ptr.hbm [resolvable:$true] %s1554
      %1560 = dma.vmem_to_hbm [thread:$0]  %s1553, 512, %s1555, [#allocation4], 128, 128, 8
    $region41: #{tpu_custom_call.1} parent=1 // pred_fallthru
      _
    // Predicated region
    $region42: #{tpu_custom_call.1} parent=1 // pred_check
      _
    $region43: #{tpu_custom_call.1} parent=1 // pred_check_branch
      %1562 = sbr.rel (0) target = $region45
    $region44: #{tpu_custom_call.1} parent=1 // pred_region
      %1564 = dma.done [#allocation4], 512
    $region45: #{tpu_custom_call.1} parent=1 // pred_fallthru
      _
    %1565 = vsyncpa [#allocation3], 1
    %1566 = vsyncpa [#allocation6], 1
    %1567 = vsyncpa [#allocation4], 1

</llo_original>
